<compile_context>
chip_gen: v7x
topology: tpu7x:2x2x1
jax: 0.10.0
libtpu: 0.0.40
codegen_flags: <defaults>
</compile_context>

<pallas_src>
import jax
import jax.numpy as jnp
import numpy as np
from jax import lax
from jax.experimental import pallas as pl
from jax.experimental.pallas import tpu as pltpu


# -----------------------------------------------------------------------------
# Pallas kernel: whole sequence in one invocation, in-kernel time loop
# -----------------------------------------------------------------------------
def lstm_fc_kernel(x_ref, wih_ref, whh_ref, b_ref, wfc_ref, bfc_ref,
                   h0_ref, c0_ref,
                   logits_ref, h_out_ref, c_out_ref,
                   xw_sc, hhist_sc, h_sc, c_sc):
    Bp, H = h0_ref.shape
    TB = x_ref.shape[0]
    T = TB // Bp

    # ---- Hoisted input projection for ALL timesteps: one big MXU matmul. ----
    # xw = x @ W_ih^T + (b_ih + b_hh)            -> (T*Bp, 4H)
    xw_sc[...] = (jnp.dot(x_ref[...], wih_ref[...],
                          preferred_element_type=jnp.float32)
                  + b_ref[...])

    # ---- Initialize carries (straight-line prologue, no pl.when). ----
    h_sc[...] = h0_ref[...]
    c_sc[...] = c0_ref[...]

    w_hh = whh_ref[...]                     # (H, 4H), loop-invariant

    # ---- Serial recurrence over time (short, fully unrolled). ----
    def step(t, carry):
        row = t * Bp
        g_x = xw_sc[pl.ds(row, Bp), :]      # (Bp, 4H) precomputed input part
        h_prev = h_sc[...]                  # (Bp, H)
        c_prev = c_sc[...]                  # (Bp, H)

        gates = g_x + jnp.dot(h_prev, w_hh,
                              preferred_element_type=jnp.float32)   # (Bp, 4H)

        # PyTorch LSTM gate ordering: input, forget, cell (g), output.
        i_g = jax.nn.sigmoid(gates[:, 0 * H:1 * H])
        f_g = jax.nn.sigmoid(gates[:, 1 * H:2 * H])
        g_g = jnp.tanh(gates[:, 2 * H:3 * H])
        o_g = jax.nn.sigmoid(gates[:, 3 * H:4 * H])

        c_new = f_g * c_prev + i_g * g_g
        h_new = o_g * jnp.tanh(c_new)

        h_sc[...] = h_new
        c_sc[...] = c_new
        hhist_sc[pl.ds(row, Bp), :] = h_new
        return carry

    lax.fori_loop(0, T, step, 0, unroll=True)

    # ---- Hoisted fc projection over all timesteps: one matmul, one store. ----
    logits_ref[...] = (jnp.dot(hhist_sc[...], wfc_ref[...],
                               preferred_element_type=jnp.float32)
                       + bfc_ref[...]).astype(logits_ref.dtype)

    # ---- Epilogue: emit final hidden/cell state. ----
    h_out_ref[...] = h_sc[...]
    c_out_ref[...] = c_sc[...]


def lstm_fc_pallas(x_flat, w_ih_t, w_hh_t, b, w_fc_t, b_fc, h0, c0, *, T, Bp):
    """x_flat: (T*Bp, 2H) time-major, batch-padded embedded input."""
    TB, twoH = x_flat.shape
    H = twoH // 2
    O = w_fc_t.shape[1]
    assert TB == T * Bp

    vmem_spec = pl.BlockSpec(memory_space=pltpu.MemorySpace.VMEM)

    out_shapes = (
        jax.ShapeDtypeStruct((TB, O), jnp.float32),   # logits (time-major rows)
        jax.ShapeDtypeStruct((Bp, H), jnp.float32),   # h_n
        jax.ShapeDtypeStruct((Bp, H), jnp.float32),   # c_n
    )

    return pl.pallas_call(
        lstm_fc_kernel,
        out_shape=out_shapes,
        in_specs=[vmem_spec] * 8,
        out_specs=(vmem_spec, vmem_spec, vmem_spec),
        scratch_shapes=[
            pltpu.VMEM((TB, 4 * H), jnp.float32),   # precomputed x @ W_ih^T + b
            pltpu.VMEM((TB, H), jnp.float32),       # h history for fused fc
            pltpu.VMEM((Bp, H), jnp.float32),       # h carry
            pltpu.VMEM((Bp, H), jnp.float32),       # c carry
        ],
    )(x_flat, w_ih_t, w_hh_t, b, w_fc_t, b_fc, h0, c0)


# -----------------------------------------------------------------------------
# NameGenerator forward (JAX glue for embeddings + concat, Pallas for LSTM+fc)
# -----------------------------------------------------------------------------
def name_generator_forward(params, input_seq, gender, hidden):
    """input_seq: (B, T) int32, gender: (B,) int32,
    hidden: (h0, c0) each (n_layers=1, B, H)."""
    h0, c0 = hidden
    B, T = input_seq.shape
    H = params["w_hh"].shape[1]
    O = params["w_fc"].shape[0]
    Bp = max(8, ((B + 7) // 8) * 8)   # pad batch to sublane width

    # Build embedded input directly in time-major layout (T, B, 2H).
    name_emb_tm = jnp.take(params["embedding"], input_seq.T, axis=0)      # (T, B, H)
    gender_emb = jnp.take(params["gender_embedding"], gender, axis=0)     # (B, H)
    gender_emb_tm = jnp.broadcast_to(gender_emb[None, :, :], (T, B, H))   # (T, B, H)
    x_tm = jnp.concatenate([name_emb_tm, gender_emb_tm], axis=2)          # (T, B, 2H)

    # Zero-pad batch to Bp and flatten time into rows: (T*Bp, 2H).
    x_tm = jnp.pad(x_tm, ((0, 0), (0, Bp - B), (0, 0)))
    x_flat = x_tm.reshape(T * Bp, 2 * H)

    h0p = jnp.pad(h0[0], ((0, Bp - B), (0, 0)))
    c0p = jnp.pad(c0[0], ((0, Bp - B), (0, 0)))

    logits_flat, h_n, c_n = lstm_fc_pallas(
        x_flat,
        params["w_ih"].T,                             # (2H, 4H)
        params["w_hh"].T,                             # (H, 4H)
        (params["b_ih"] + params["b_hh"])[None, :],   # (1, 4H)
        params["w_fc"].T,                             # (H, O)
        params["b_fc"][None, :],                      # (1, O)
        h0p, c0p, T=T, Bp=Bp,
    )

    logits = logits_flat.reshape(T, Bp, O)[:, :B, :]  # (T, B, O)
    output = jnp.transpose(logits, (1, 0, 2))         # (B, T, O) batch_first
    return output, (h_n[:B][None, ...], c_n[:B][None, ...])


# -----------------------------------------------------------------------------
# Pure-JAX reference (lax.scan) for correctness checking
# -----------------------------------------------------------------------------
def name_generator_ref(params, input_seq, gender, hidden):
    h0, c0 = hidden
    H = params["w_hh"].shape[1]
    name_embedded = jnp.take(params["embedding"], input_seq, axis=0)
    gender_embedded = jnp.take(params["gender_embedding"], gender, axis=0)
    gender_embedded = jnp.broadcast_to(gender_embedded[:, None, :], name_embedded.shape)
    combined = jnp.concatenate([name_embedded, gender_embedded], axis=2)
    x_tm = jnp.transpose(combined, (1, 0, 2))

    def step(carry, x_t):
        h, c = carry
        gates = (x_t @ params["w_ih"].T + params["b_ih"]
                 + h @ params["w_hh"].T + params["b_hh"])
        i = jax.nn.sigmoid(gates[:, 0 * H:1 * H])
        f = jax.nn.sigmoid(gates[:, 1 * H:2 * H])
        g = jnp.tanh(gates[:, 2 * H:3 * H])
        o = jax.nn.sigmoid(gates[:, 3 * H:4 * H])
        c = f * c + i * g
        h = o * jnp.tanh(c)
        return (h, c), h

    (h_n, c_n), hs = lax.scan(step, (h0[0], c0[0]), x_tm)
    logits = hs @ params["w_fc"].T + params["b_fc"]
    return jnp.transpose(logits, (1, 0, 2)), (h_n[None], c_n[None])


if __name__ == "__main__":
    # Model dims
    input_size = 16     # vocab
    gender_size = 2
    hidden_size = 32
    output_size = 16
    n_layers = 1

    # Example dims
    B, T = 2, 8

    key = jax.random.PRNGKey(0)
    ks = jax.random.split(key, 10)
    params = {
        "embedding":        0.1 * jax.random.normal(ks[0], (input_size, hidden_size), jnp.float32),
        "gender_embedding": 0.1 * jax.random.normal(ks[1], (gender_size, hidden_size), jnp.float32),
        "w_ih":             0.1 * jax.random.normal(ks[2], (4 * hidden_size, 2 * hidden_size), jnp.float32),
        "w_hh":             0.1 * jax.random.normal(ks[3], (4 * hidden_size, hidden_size), jnp.float32),
        "b_ih":             0.1 * jax.random.normal(ks[4], (4 * hidden_size,), jnp.float32),
        "b_hh":             0.1 * jax.random.normal(ks[5], (4 * hidden_size,), jnp.float32),
        "w_fc":             0.1 * jax.random.normal(ks[6], (output_size, hidden_size), jnp.float32),
        "b_fc":             0.1 * jax.random.normal(ks[7], (output_size,), jnp.float32),
    }

    input_seq = jax.random.randint(ks[8], (B, T), 0, input_size, dtype=jnp.int32)
    gender = jax.random.randint(ks[9], (B,), 0, gender_size, dtype=jnp.int32)
    hidden = (jnp.zeros((n_layers, B, hidden_size), jnp.float32),
              jnp.zeros((n_layers, B, hidden_size), jnp.float32))

    out, (h_n, c_n) = jax.jit(name_generator_forward)(params, input_seq, gender, hidden)
    out = jax.block_until_ready(out)
    h_n = jax.block_until_ready(h_n)
    c_n = jax.block_until_ready(c_n)

    # Verify against pure-JAX reference
    out_ref, (h_ref, c_ref) = name_generator_ref(params, input_seq, gender, hidden)
    assert out.shape == (B, T, output_size)
    assert h_n.shape == (n_layers, B, hidden_size)
    assert c_n.shape == (n_layers, B, hidden_size)
    assert np.allclose(np.asarray(out), np.asarray(out_ref), rtol=1e-4, atol=1e-5)
    assert np.allclose(np.asarray(h_n), np.asarray(h_ref), rtol=1e-4, atol=1e-5)
    assert np.allclose(np.asarray(c_n), np.asarray(c_ref), rtol=1e-4, atol=1e-5)

    print("KERNEL_OK")
</pallas_src>

<mosaic_0001>
module attributes {stable_mosaic.version = 11 : i64} {
  func.func @lstm_fc_kernel(%arg0: memref<64x64xf32, #tpu.memory_space<vmem>>, %arg1: memref<64x128xf32, #tpu.memory_space<vmem>>, %arg2: memref<32x128xf32, #tpu.memory_space<vmem>>, %arg3: memref<1x128xf32, #tpu.memory_space<vmem>>, %arg4: memref<32x16xf32, #tpu.memory_space<vmem>>, %arg5: memref<1x16xf32, #tpu.memory_space<vmem>>, %arg6: memref<8x32xf32, #tpu.memory_space<vmem>>, %arg7: memref<8x32xf32, #tpu.memory_space<vmem>>, %arg8: memref<64x16xf32, #tpu.memory_space<vmem>>, %arg9: memref<8x32xf32, #tpu.memory_space<vmem>>, %arg10: memref<8x32xf32, #tpu.memory_space<vmem>>, %arg11: memref<64x128xf32, #tpu.memory_space<vmem>>, %arg12: memref<64x32xf32, #tpu.memory_space<vmem>>, %arg13: memref<8x32xf32, #tpu.memory_space<vmem>>, %arg14: memref<8x32xf32, #tpu.memory_space<vmem>>) attributes {dimension_semantics = [], scalar_prefetch = 0 : i64, scratch_operands = 4 : i64, tpu.core_type = #tpu.core_type<tc>} {
    %c0 = arith.constant 0 : index
    %c0_0 = arith.constant 0 : index
    %0 = vector.load %arg0[%c0, %c0_0] : memref<64x64xf32, #tpu.memory_space<vmem>>, vector<64x64xf32>
    %c0_1 = arith.constant 0 : index
    %c0_2 = arith.constant 0 : index
    %1 = vector.load %arg1[%c0_1, %c0_2] : memref<64x128xf32, #tpu.memory_space<vmem>>, vector<64x128xf32>
    %cst = arith.constant dense<0.000000e+00> : vector<64x128xf32>
    %2 = tpu.matmul %0, %1, %cst {dimension_numbers = #tpu.dot_dimension_numbers<[1], [0], [0], [1], [0, 0, 1, 1], [], []>} : vector<64x64xf32>, vector<64x128xf32>, vector<64x128xf32> -> vector<64x128xf32>
    %c0_3 = arith.constant 0 : index
    %c0_4 = arith.constant 0 : index
    %3 = vector.load %arg3[%c0_3, %c0_4] : memref<1x128xf32, #tpu.memory_space<vmem>>, vector<1x128xf32>
    %4 = vector.broadcast %3 : vector<1x128xf32> to vector<64x128xf32>
    %5 = arith.addf %2, %4 : vector<64x128xf32>
    %c0_5 = arith.constant 0 : index
    %c0_6 = arith.constant 0 : index
    %6 = vector.load %arg11[%c0_5, %c0_6] : memref<64x128xf32, #tpu.memory_space<vmem>>, vector<64x128xf32>
    tpu.vector_store %arg11[%c0_5, %c0_6], %5 {strides = array<i32>} : memref<64x128xf32, #tpu.memory_space<vmem>>, vector<64x128xf32>,
    %c0_7 = arith.constant 0 : index
    %c0_8 = arith.constant 0 : index
    %7 = vector.load %arg6[%c0_7, %c0_8] : memref<8x32xf32, #tpu.memory_space<vmem>>, vector<8x32xf32>
    %c0_9 = arith.constant 0 : index
    %c0_10 = arith.constant 0 : index
    %8 = vector.load %arg13[%c0_9, %c0_10] : memref<8x32xf32, #tpu.memory_space<vmem>>, vector<8x32xf32>
    tpu.vector_store %arg13[%c0_9, %c0_10], %7 {strides = array<i32>} : memref<8x32xf32, #tpu.memory_space<vmem>>, vector<8x32xf32>,
    %c0_11 = arith.constant 0 : index
    %c0_12 = arith.constant 0 : index
    %9 = vector.load %arg7[%c0_11, %c0_12] : memref<8x32xf32, #tpu.memory_space<vmem>>, vector<8x32xf32>
    %c0_13 = arith.constant 0 : index
    %c0_14 = arith.constant 0 : index
    %10 = vector.load %arg14[%c0_13, %c0_14] : memref<8x32xf32, #tpu.memory_space<vmem>>, vector<8x32xf32>
    tpu.vector_store %arg14[%c0_13, %c0_14], %9 {strides = array<i32>} : memref<8x32xf32, #tpu.memory_space<vmem>>, vector<8x32xf32>,
    %c0_15 = arith.constant 0 : index
    %c0_16 = arith.constant 0 : index
    %11 = vector.load %arg2[%c0_15, %c0_16] : memref<32x128xf32, #tpu.memory_space<vmem>>, vector<32x128xf32>
    %c0_i32 = arith.constant 0 : i32
    %c8_i32 = arith.constant 8 : i32
    %12 = arith.muli %c0_i32, %c8_i32 : i32
    %13 = arith.index_cast %12 : i32 to index
    %c0_17 = arith.constant 0 : index
    %14 = vector.load %arg11[%13, %c0_17] : memref<64x128xf32, #tpu.memory_space<vmem>>, vector<8x128xf32>
    %c0_18 = arith.constant 0 : index
    %c0_19 = arith.constant 0 : index
    %15 = vector.load %arg13[%c0_18, %c0_19] : memref<8x32xf32, #tpu.memory_space<vmem>>, vector<8x32xf32>
    %c0_20 = arith.constant 0 : index
    %c0_21 = arith.constant 0 : index
    %16 = vector.load %arg14[%c0_20, %c0_21] : memref<8x32xf32, #tpu.memory_space<vmem>>, vector<8x32xf32>
    %cst_22 = arith.constant dense<0.000000e+00> : vector<8x128xf32>
    %17 = tpu.matmul %15, %11, %cst_22 {dimension_numbers = #tpu.dot_dimension_numbers<[1], [0], [0], [1], [0, 0, 1, 1], [], []>} : vector<8x32xf32>, vector<32x128xf32>, vector<8x128xf32> -> vector<8x128xf32>
    %18 = arith.addf %14, %17 : vector<8x128xf32>
    %19 = vector.extract_strided_slice %18 {offsets = [0, 0], sizes = [8, 32], strides = [1, 1]} : vector<8x128xf32> to vector<8x32xf32>
    %20 = arith.negf %19 : vector<8x32xf32>
    %21 = math.exp %20 : vector<8x32xf32>
    %cst_23 = arith.constant 1.000000e+00 : f32
    %22 = vector.broadcast %cst_23 : f32 to vector<8x32xf32>
    %23 = arith.addf %22, %21 : vector<8x32xf32>
    %24 = arith.divf %22, %23 : vector<8x32xf32>
    %25 = vector.extract_strided_slice %18 {offsets = [0, 32], sizes = [8, 32], strides = [1, 1]} : vector<8x128xf32> to vector<8x32xf32>
    %26 = arith.negf %25 : vector<8x32xf32>
    %27 = math.exp %26 : vector<8x32xf32>
    %cst_24 = arith.constant 1.000000e+00 : f32
    %28 = vector.broadcast %cst_24 : f32 to vector<8x32xf32>
    %29 = arith.addf %28, %27 : vector<8x32xf32>
    %30 = arith.divf %28, %29 : vector<8x32xf32>
    %31 = vector.extract_strided_slice %18 {offsets = [0, 64], sizes = [8, 32], strides = [1, 1]} : vector<8x128xf32> to vector<8x32xf32>
    %32 = math.tanh %31 : vector<8x32xf32>
    %33 = vector.extract_strided_slice %18 {offsets = [0, 96], sizes = [8, 32], strides = [1, 1]} : vector<8x128xf32> to vector<8x32xf32>
    %34 = arith.negf %33 : vector<8x32xf32>
    %35 = math.exp %34 : vector<8x32xf32>
    %cst_25 = arith.constant 1.000000e+00 : f32
    %36 = vector.broadcast %cst_25 : f32 to vector<8x32xf32>
    %37 = arith.addf %36, %35 : vector<8x32xf32>
    %38 = arith.divf %36, %37 : vector<8x32xf32>
    %39 = arith.mulf %30, %16 : vector<8x32xf32>
    %40 = arith.mulf %24, %32 : vector<8x32xf32>
    %41 = arith.addf %39, %40 : vector<8x32xf32>
    %42 = math.tanh %41 : vector<8x32xf32>
    %43 = arith.mulf %38, %42 : vector<8x32xf32>
    %c0_26 = arith.constant 0 : index
    %c0_27 = arith.constant 0 : index
    %44 = vector.load %arg13[%c0_26, %c0_27] : memref<8x32xf32, #tpu.memory_space<vmem>>, vector<8x32xf32>
    tpu.vector_store %arg13[%c0_26, %c0_27], %43 {strides = array<i32>} : memref<8x32xf32, #tpu.memory_space<vmem>>, vector<8x32xf32>,
    %c0_28 = arith.constant 0 : index
    %c0_29 = arith.constant 0 : index
    %45 = vector.load %arg14[%c0_28, %c0_29] : memref<8x32xf32, #tpu.memory_space<vmem>>, vector<8x32xf32>
    tpu.vector_store %arg14[%c0_28, %c0_29], %41 {strides = array<i32>} : memref<8x32xf32, #tpu.memory_space<vmem>>, vector<8x32xf32>,
    %46 = arith.index_cast %12 : i32 to index
    %c0_30 = arith.constant 0 : index
    %47 = vector.load %arg12[%46, %c0_30] : memref<64x32xf32, #tpu.memory_space<vmem>>, vector<8x32xf32>
    tpu.vector_store %arg12[%46, %c0_30], %43 {strides = array<i32>} : memref<64x32xf32, #tpu.memory_space<vmem>>, vector<8x32xf32>,
    %c1_i32 = arith.constant 1 : i32
    %c8_i32_31 = arith.constant 8 : i32
    %48 = arith.muli %c1_i32, %c8_i32_31 : i32
    %49 = arith.index_cast %48 : i32 to index
    %c0_32 = arith.constant 0 : index
    %50 = vector.load %arg11[%49, %c0_32] : memref<64x128xf32, #tpu.memory_space<vmem>>, vector<8x128xf32>
    %c0_33 = arith.constant 0 : index
    %c0_34 = arith.constant 0 : index
    %51 = vector.load %arg13[%c0_33, %c0_34] : memref<8x32xf32, #tpu.memory_space<vmem>>, vector<8x32xf32>
    %c0_35 = arith.constant 0 : index
    %c0_36 = arith.constant 0 : index
    %52 = vector.load %arg14[%c0_35, %c0_36] : memref<8x32xf32, #tpu.memory_space<vmem>>, vector<8x32xf32>
    %cst_37 = arith.constant dense<0.000000e+00> : vector<8x128xf32>
    %53 = tpu.matmul %51, %11, %cst_37 {dimension_numbers = #tpu.dot_dimension_numbers<[1], [0], [0], [1], [0, 0, 1, 1], [], []>} : vector<8x32xf32>, vector<32x128xf32>, vector<8x128xf32> -> vector<8x128xf32>
    %54 = arith.addf %50, %53 : vector<8x128xf32>
    %55 = vector.extract_strided_slice %54 {offsets = [0, 0], sizes = [8, 32], strides = [1, 1]} : vector<8x128xf32> to vector<8x32xf32>
    %56 = arith.negf %55 : vector<8x32xf32>
    %57 = math.exp %56 : vector<8x32xf32>
    %cst_38 = arith.constant 1.000000e+00 : f32
    %58 = vector.broadcast %cst_38 : f32 to vector<8x32xf32>
    %59 = arith.addf %58, %57 : vector<8x32xf32>
    %60 = arith.divf %58, %59 : vector<8x32xf32>
    %61 = vector.extract_strided_slice %54 {offsets = [0, 32], sizes = [8, 32], strides = [1, 1]} : vector<8x128xf32> to vector<8x32xf32>
    %62 = arith.negf %61 : vector<8x32xf32>
    %63 = math.exp %62 : vector<8x32xf32>
    %cst_39 = arith.constant 1.000000e+00 : f32
    %64 = vector.broadcast %cst_39 : f32 to vector<8x32xf32>
    %65 = arith.addf %64, %63 : vector<8x32xf32>
    %66 = arith.divf %64, %65 : vector<8x32xf32>
    %67 = vector.extract_strided_slice %54 {offsets = [0, 64], sizes = [8, 32], strides = [1, 1]} : vector<8x128xf32> to vector<8x32xf32>
    %68 = math.tanh %67 : vector<8x32xf32>
    %69 = vector.extract_strided_slice %54 {offsets = [0, 96], sizes = [8, 32], strides = [1, 1]} : vector<8x128xf32> to vector<8x32xf32>
    %70 = arith.negf %69 : vector<8x32xf32>
    %71 = math.exp %70 : vector<8x32xf32>
    %cst_40 = arith.constant 1.000000e+00 : f32
    %72 = vector.broadcast %cst_40 : f32 to vector<8x32xf32>
    %73 = arith.addf %72, %71 : vector<8x32xf32>
    %74 = arith.divf %72, %73 : vector<8x32xf32>
    %75 = arith.mulf %66, %52 : vector<8x32xf32>
    %76 = arith.mulf %60, %68 : vector<8x32xf32>
    %77 = arith.addf %75, %76 : vector<8x32xf32>
    %78 = math.tanh %77 : vector<8x32xf32>
    %79 = arith.mulf %74, %78 : vector<8x32xf32>
    %c0_41 = arith.constant 0 : index
    %c0_42 = arith.constant 0 : index
    %80 = vector.load %arg13[%c0_41, %c0_42] : memref<8x32xf32, #tpu.memory_space<vmem>>, vector<8x32xf32>
    tpu.vector_store %arg13[%c0_41, %c0_42], %79 {strides = array<i32>} : memref<8x32xf32, #tpu.memory_space<vmem>>, vector<8x32xf32>,
    %c0_43 = arith.constant 0 : index
    %c0_44 = arith.constant 0 : index
    %81 = vector.load %arg14[%c0_43, %c0_44] : memref<8x32xf32, #tpu.memory_space<vmem>>, vector<8x32xf32>
    tpu.vector_store %arg14[%c0_43, %c0_44], %77 {strides = array<i32>} : memref<8x32xf32, #tpu.memory_space<vmem>>, vector<8x32xf32>,
    %82 = arith.index_cast %48 : i32 to index
    %c0_45 = arith.constant 0 : index
    %83 = vector.load %arg12[%82, %c0_45] : memref<64x32xf32, #tpu.memory_space<vmem>>, vector<8x32xf32>
    tpu.vector_store %arg12[%82, %c0_45], %79 {strides = array<i32>} : memref<64x32xf32, #tpu.memory_space<vmem>>, vector<8x32xf32>,
    %c2_i32 = arith.constant 2 : i32
    %c8_i32_46 = arith.constant 8 : i32
    %84 = arith.muli %c2_i32, %c8_i32_46 : i32
    %85 = arith.index_cast %84 : i32 to index
    %c0_47 = arith.constant 0 : index
    %86 = vector.load %arg11[%85, %c0_47] : memref<64x128xf32, #tpu.memory_space<vmem>>, vector<8x128xf32>
    %c0_48 = arith.constant 0 : index
    %c0_49 = arith.constant 0 : index
    %87 = vector.load %arg13[%c0_48, %c0_49] : memref<8x32xf32, #tpu.memory_space<vmem>>, vector<8x32xf32>
    %c0_50 = arith.constant 0 : index
    %c0_51 = arith.constant 0 : index
    %88 = vector.load %arg14[%c0_50, %c0_51] : memref<8x32xf32, #tpu.memory_space<vmem>>, vector<8x32xf32>
    %cst_52 = arith.constant dense<0.000000e+00> : vector<8x128xf32>
    %89 = tpu.matmul %87, %11, %cst_52 {dimension_numbers = #tpu.dot_dimension_numbers<[1], [0], [0], [1], [0, 0, 1, 1], [], []>} : vector<8x32xf32>, vector<32x128xf32>, vector<8x128xf32> -> vector<8x128xf32>
    %90 = arith.addf %86, %89 : vector<8x128xf32>
    %91 = vector.extract_strided_slice %90 {offsets = [0, 0], sizes = [8, 32], strides = [1, 1]} : vector<8x128xf32> to vector<8x32xf32>
    %92 = arith.negf %91 : vector<8x32xf32>
    %93 = math.exp %92 : vector<8x32xf32>
    %cst_53 = arith.constant 1.000000e+00 : f32
    %94 = vector.broadcast %cst_53 : f32 to vector<8x32xf32>
    %95 = arith.addf %94, %93 : vector<8x32xf32>
    %96 = arith.divf %94, %95 : vector<8x32xf32>
    %97 = vector.extract_strided_slice %90 {offsets = [0, 32], sizes = [8, 32], strides = [1, 1]} : vector<8x128xf32> to vector<8x32xf32>
    %98 = arith.negf %97 : vector<8x32xf32>
    %99 = math.exp %98 : vector<8x32xf32>
    %cst_54 = arith.constant 1.000000e+00 : f32
    %100 = vector.broadcast %cst_54 : f32 to vector<8x32xf32>
    %101 = arith.addf %100, %99 : vector<8x32xf32>
    %102 = arith.divf %100, %101 : vector<8x32xf32>
    %103 = vector.extract_strided_slice %90 {offsets = [0, 64], sizes = [8, 32], strides = [1, 1]} : vector<8x128xf32> to vector<8x32xf32>
    %104 = math.tanh %103 : vector<8x32xf32>
    %105 = vector.extract_strided_slice %90 {offsets = [0, 96], sizes = [8, 32], strides = [1, 1]} : vector<8x128xf32> to vector<8x32xf32>
    %106 = arith.negf %105 : vector<8x32xf32>
    %107 = math.exp %106 : vector<8x32xf32>
    %cst_55 = arith.constant 1.000000e+00 : f32
    %108 = vector.broadcast %cst_55 : f32 to vector<8x32xf32>
    %109 = arith.addf %108, %107 : vector<8x32xf32>
    %110 = arith.divf %108, %109 : vector<8x32xf32>
    %111 = arith.mulf %102, %88 : vector<8x32xf32>
    %112 = arith.mulf %96, %104 : vector<8x32xf32>
    %113 = arith.addf %111, %112 : vector<8x32xf32>
    %114 = math.tanh %113 : vector<8x32xf32>
    %115 = arith.mulf %110, %114 : vector<8x32xf32>
    %c0_56 = arith.constant 0 : index
    %c0_57 = arith.constant 0 : index
    %116 = vector.load %arg13[%c0_56, %c0_57] : memref<8x32xf32, #tpu.memory_space<vmem>>, vector<8x32xf32>
    tpu.vector_store %arg13[%c0_56, %c0_57], %115 {strides = array<i32>} : memref<8x32xf32, #tpu.memory_space<vmem>>, vector<8x32xf32>,
    %c0_58 = arith.constant 0 : index
    %c0_59 = arith.constant 0 : index
    %117 = vector.load %arg14[%c0_58, %c0_59] : memref<8x32xf32, #tpu.memory_space<vmem>>, vector<8x32xf32>
    tpu.vector_store %arg14[%c0_58, %c0_59], %113 {strides = array<i32>} : memref<8x32xf32, #tpu.memory_space<vmem>>, vector<8x32xf32>,
    %118 = arith.index_cast %84 : i32 to index
    %c0_60 = arith.constant 0 : index
    %119 = vector.load %arg12[%118, %c0_60] : memref<64x32xf32, #tpu.memory_space<vmem>>, vector<8x32xf32>
    tpu.vector_store %arg12[%118, %c0_60], %115 {strides = array<i32>} : memref<64x32xf32, #tpu.memory_space<vmem>>, vector<8x32xf32>,
    %c3_i32 = arith.constant 3 : i32
    %c8_i32_61 = arith.constant 8 : i32
    %120 = arith.muli %c3_i32, %c8_i32_61 : i32
    %121 = arith.index_cast %120 : i32 to index
    %c0_62 = arith.constant 0 : index
    %122 = vector.load %arg11[%121, %c0_62] : memref<64x128xf32, #tpu.memory_space<vmem>>, vector<8x128xf32>
    %c0_63 = arith.constant 0 : index
    %c0_64 = arith.constant 0 : index
    %123 = vector.load %arg13[%c0_63, %c0_64] : memref<8x32xf32, #tpu.memory_space<vmem>>, vector<8x32xf32>
    %c0_65 = arith.constant 0 : index
    %c0_66 = arith.constant 0 : index
    %124 = vector.load %arg14[%c0_65, %c0_66] : memref<8x32xf32, #tpu.memory_space<vmem>>, vector<8x32xf32>
    %cst_67 = arith.constant dense<0.000000e+00> : vector<8x128xf32>
    %125 = tpu.matmul %123, %11, %cst_67 {dimension_numbers = #tpu.dot_dimension_numbers<[1], [0], [0], [1], [0, 0, 1, 1], [], []>} : vector<8x32xf32>, vector<32x128xf32>, vector<8x128xf32> -> vector<8x128xf32>
    %126 = arith.addf %122, %125 : vector<8x128xf32>
    %127 = vector.extract_strided_slice %126 {offsets = [0, 0], sizes = [8, 32], strides = [1, 1]} : vector<8x128xf32> to vector<8x32xf32>
    %128 = arith.negf %127 : vector<8x32xf32>
    %129 = math.exp %128 : vector<8x32xf32>
    %cst_68 = arith.constant 1.000000e+00 : f32
    %130 = vector.broadcast %cst_68 : f32 to vector<8x32xf32>
    %131 = arith.addf %130, %129 : vector<8x32xf32>
    %132 = arith.divf %130, %131 : vector<8x32xf32>
    %133 = vector.extract_strided_slice %126 {offsets = [0, 32], sizes = [8, 32], strides = [1, 1]} : vector<8x128xf32> to vector<8x32xf32>
    %134 = arith.negf %133 : vector<8x32xf32>
    %135 = math.exp %134 : vector<8x32xf32>
    %cst_69 = arith.constant 1.000000e+00 : f32
    %136 = vector.broadcast %cst_69 : f32 to vector<8x32xf32>
    %137 = arith.addf %136, %135 : vector<8x32xf32>
    %138 = arith.divf %136, %137 : vector<8x32xf32>
    %139 = vector.extract_strided_slice %126 {offsets = [0, 64], sizes = [8, 32], strides = [1, 1]} : vector<8x128xf32> to vector<8x32xf32>
    %140 = math.tanh %139 : vector<8x32xf32>
    %141 = vector.extract_strided_slice %126 {offsets = [0, 96], sizes = [8, 32], strides = [1, 1]} : vector<8x128xf32> to vector<8x32xf32>
    %142 = arith.negf %141 : vector<8x32xf32>
    %143 = math.exp %142 : vector<8x32xf32>
    %cst_70 = arith.constant 1.000000e+00 : f32
    %144 = vector.broadcast %cst_70 : f32 to vector<8x32xf32>
    %145 = arith.addf %144, %143 : vector<8x32xf32>
    %146 = arith.divf %144, %145 : vector<8x32xf32>
    %147 = arith.mulf %138, %124 : vector<8x32xf32>
    %148 = arith.mulf %132, %140 : vector<8x32xf32>
    %149 = arith.addf %147, %148 : vector<8x32xf32>
    %150 = math.tanh %149 : vector<8x32xf32>
    %151 = arith.mulf %146, %150 : vector<8x32xf32>
    %c0_71 = arith.constant 0 : index
    %c0_72 = arith.constant 0 : index
    %152 = vector.load %arg13[%c0_71, %c0_72] : memref<8x32xf32, #tpu.memory_space<vmem>>, vector<8x32xf32>
    tpu.vector_store %arg13[%c0_71, %c0_72], %151 {strides = array<i32>} : memref<8x32xf32, #tpu.memory_space<vmem>>, vector<8x32xf32>,
    %c0_73 = arith.constant 0 : index
    %c0_74 = arith.constant 0 : index
    %153 = vector.load %arg14[%c0_73, %c0_74] : memref<8x32xf32, #tpu.memory_space<vmem>>, vector<8x32xf32>
    tpu.vector_store %arg14[%c0_73, %c0_74], %149 {strides = array<i32>} : memref<8x32xf32, #tpu.memory_space<vmem>>, vector<8x32xf32>,
    %154 = arith.index_cast %120 : i32 to index
    %c0_75 = arith.constant 0 : index
    %155 = vector.load %arg12[%154, %c0_75] : memref<64x32xf32, #tpu.memory_space<vmem>>, vector<8x32xf32>
    tpu.vector_store %arg12[%154, %c0_75], %151 {strides = array<i32>} : memref<64x32xf32, #tpu.memory_space<vmem>>, vector<8x32xf32>,
    %c4_i32 = arith.constant 4 : i32
    %c8_i32_76 = arith.constant 8 : i32
    %156 = arith.muli %c4_i32, %c8_i32_76 : i32
    %157 = arith.index_cast %156 : i32 to index
    %c0_77 = arith.constant 0 : index
    %158 = vector.load %arg11[%157, %c0_77] : memref<64x128xf32, #tpu.memory_space<vmem>>, vector<8x128xf32>
    %c0_78 = arith.constant 0 : index
    %c0_79 = arith.constant 0 : index
    %159 = vector.load %arg13[%c0_78, %c0_79] : memref<8x32xf32, #tpu.memory_space<vmem>>, vector<8x32xf32>
    %c0_80 = arith.constant 0 : index
    %c0_81 = arith.constant 0 : index
    %160 = vector.load %arg14[%c0_80, %c0_81] : memref<8x32xf32, #tpu.memory_space<vmem>>, vector<8x32xf32>
    %cst_82 = arith.constant dense<0.000000e+00> : vector<8x128xf32>
    %161 = tpu.matmul %159, %11, %cst_82 {dimension_numbers = #tpu.dot_dimension_numbers<[1], [0], [0], [1], [0, 0, 1, 1], [], []>} : vector<8x32xf32>, vector<32x128xf32>, vector<8x128xf32> -> vector<8x128xf32>
    %162 = arith.addf %158, %161 : vector<8x128xf32>
    %163 = vector.extract_strided_slice %162 {offsets = [0, 0], sizes = [8, 32], strides = [1, 1]} : vector<8x128xf32> to vector<8x32xf32>
    %164 = arith.negf %163 : vector<8x32xf32>
    %165 = math.exp %164 : vector<8x32xf32>
    %cst_83 = arith.constant 1.000000e+00 : f32
    %166 = vector.broadcast %cst_83 : f32 to vector<8x32xf32>
    %167 = arith.addf %166, %165 : vector<8x32xf32>
    %168 = arith.divf %166, %167 : vector<8x32xf32>
    %169 = vector.extract_strided_slice %162 {offsets = [0, 32], sizes = [8, 32], strides = [1, 1]} : vector<8x128xf32> to vector<8x32xf32>
    %170 = arith.negf %169 : vector<8x32xf32>
    %171 = math.exp %170 : vector<8x32xf32>
    %cst_84 = arith.constant 1.000000e+00 : f32
    %172 = vector.broadcast %cst_84 : f32 to vector<8x32xf32>
    %173 = arith.addf %172, %171 : vector<8x32xf32>
    %174 = arith.divf %172, %173 : vector<8x32xf32>
    %175 = vector.extract_strided_slice %162 {offsets = [0, 64], sizes = [8, 32], strides = [1, 1]} : vector<8x128xf32> to vector<8x32xf32>
    %176 = math.tanh %175 : vector<8x32xf32>
    %177 = vector.extract_strided_slice %162 {offsets = [0, 96], sizes = [8, 32], strides = [1, 1]} : vector<8x128xf32> to vector<8x32xf32>
    %178 = arith.negf %177 : vector<8x32xf32>
    %179 = math.exp %178 : vector<8x32xf32>
    %cst_85 = arith.constant 1.000000e+00 : f32
    %180 = vector.broadcast %cst_85 : f32 to vector<8x32xf32>
    %181 = arith.addf %180, %179 : vector<8x32xf32>
    %182 = arith.divf %180, %181 : vector<8x32xf32>
    %183 = arith.mulf %174, %160 : vector<8x32xf32>
    %184 = arith.mulf %168, %176 : vector<8x32xf32>
    %185 = arith.addf %183, %184 : vector<8x32xf32>
    %186 = math.tanh %185 : vector<8x32xf32>
    %187 = arith.mulf %182, %186 : vector<8x32xf32>
    %c0_86 = arith.constant 0 : index
    %c0_87 = arith.constant 0 : index
    %188 = vector.load %arg13[%c0_86, %c0_87] : memref<8x32xf32, #tpu.memory_space<vmem>>, vector<8x32xf32>
    tpu.vector_store %arg13[%c0_86, %c0_87], %187 {strides = array<i32>} : memref<8x32xf32, #tpu.memory_space<vmem>>, vector<8x32xf32>,
    %c0_88 = arith.constant 0 : index
    %c0_89 = arith.constant 0 : index
    %189 = vector.load %arg14[%c0_88, %c0_89] : memref<8x32xf32, #tpu.memory_space<vmem>>, vector<8x32xf32>
    tpu.vector_store %arg14[%c0_88, %c0_89], %185 {strides = array<i32>} : memref<8x32xf32, #tpu.memory_space<vmem>>, vector<8x32xf32>,
    %190 = arith.index_cast %156 : i32 to index
    %c0_90 = arith.constant 0 : index
    %191 = vector.load %arg12[%190, %c0_90] : memref<64x32xf32, #tpu.memory_space<vmem>>, vector<8x32xf32>
    tpu.vector_store %arg12[%190, %c0_90], %187 {strides = array<i32>} : memref<64x32xf32, #tpu.memory_space<vmem>>, vector<8x32xf32>,
    %c5_i32 = arith.constant 5 : i32
    %c8_i32_91 = arith.constant 8 : i32
    %192 = arith.muli %c5_i32, %c8_i32_91 : i32
    %193 = arith.index_cast %192 : i32 to index
    %c0_92 = arith.constant 0 : index
    %194 = vector.load %arg11[%193, %c0_92] : memref<64x128xf32, #tpu.memory_space<vmem>>, vector<8x128xf32>
    %c0_93 = arith.constant 0 : index
    %c0_94 = arith.constant 0 : index
    %195 = vector.load %arg13[%c0_93, %c0_94] : memref<8x32xf32, #tpu.memory_space<vmem>>, vector<8x32xf32>
    %c0_95 = arith.constant 0 : index
    %c0_96 = arith.constant 0 : index
    %196 = vector.load %arg14[%c0_95, %c0_96] : memref<8x32xf32, #tpu.memory_space<vmem>>, vector<8x32xf32>
    %cst_97 = arith.constant dense<0.000000e+00> : vector<8x128xf32>
    %197 = tpu.matmul %195, %11, %cst_97 {dimension_numbers = #tpu.dot_dimension_numbers<[1], [0], [0], [1], [0, 0, 1, 1], [], []>} : vector<8x32xf32>, vector<32x128xf32>, vector<8x128xf32> -> vector<8x128xf32>
    %198 = arith.addf %194, %197 : vector<8x128xf32>
    %199 = vector.extract_strided_slice %198 {offsets = [0, 0], sizes = [8, 32], strides = [1, 1]} : vector<8x128xf32> to vector<8x32xf32>
    %200 = arith.negf %199 : vector<8x32xf32>
    %201 = math.exp %200 : vector<8x32xf32>
    %cst_98 = arith.constant 1.000000e+00 : f32
    %202 = vector.broadcast %cst_98 : f32 to vector<8x32xf32>
    %203 = arith.addf %202, %201 : vector<8x32xf32>
    %204 = arith.divf %202, %203 : vector<8x32xf32>
    %205 = vector.extract_strided_slice %198 {offsets = [0, 32], sizes = [8, 32], strides = [1, 1]} : vector<8x128xf32> to vector<8x32xf32>
    %206 = arith.negf %205 : vector<8x32xf32>
    %207 = math.exp %206 : vector<8x32xf32>
    %cst_99 = arith.constant 1.000000e+00 : f32
    %208 = vector.broadcast %cst_99 : f32 to vector<8x32xf32>
    %209 = arith.addf %208, %207 : vector<8x32xf32>
    %210 = arith.divf %208, %209 : vector<8x32xf32>
    %211 = vector.extract_strided_slice %198 {offsets = [0, 64], sizes = [8, 32], strides = [1, 1]} : vector<8x128xf32> to vector<8x32xf32>
    %212 = math.tanh %211 : vector<8x32xf32>
    %213 = vector.extract_strided_slice %198 {offsets = [0, 96], sizes = [8, 32], strides = [1, 1]} : vector<8x128xf32> to vector<8x32xf32>
    %214 = arith.negf %213 : vector<8x32xf32>
    %215 = math.exp %214 : vector<8x32xf32>
    %cst_100 = arith.constant 1.000000e+00 : f32
    %216 = vector.broadcast %cst_100 : f32 to vector<8x32xf32>
    %217 = arith.addf %216, %215 : vector<8x32xf32>
    %218 = arith.divf %216, %217 : vector<8x32xf32>
    %219 = arith.mulf %210, %196 : vector<8x32xf32>
    %220 = arith.mulf %204, %212 : vector<8x32xf32>
    %221 = arith.addf %219, %220 : vector<8x32xf32>
    %222 = math.tanh %221 : vector<8x32xf32>
    %223 = arith.mulf %218, %222 : vector<8x32xf32>
    %c0_101 = arith.constant 0 : index
    %c0_102 = arith.constant 0 : index
    %224 = vector.load %arg13[%c0_101, %c0_102] : memref<8x32xf32, #tpu.memory_space<vmem>>, vector<8x32xf32>
    tpu.vector_store %arg13[%c0_101, %c0_102], %223 {strides = array<i32>} : memref<8x32xf32, #tpu.memory_space<vmem>>, vector<8x32xf32>,
    %c0_103 = arith.constant 0 : index
    %c0_104 = arith.constant 0 : index
    %225 = vector.load %arg14[%c0_103, %c0_104] : memref<8x32xf32, #tpu.memory_space<vmem>>, vector<8x32xf32>
    tpu.vector_store %arg14[%c0_103, %c0_104], %221 {strides = array<i32>} : memref<8x32xf32, #tpu.memory_space<vmem>>, vector<8x32xf32>,
    %226 = arith.index_cast %192 : i32 to index
    %c0_105 = arith.constant 0 : index
    %227 = vector.load %arg12[%226, %c0_105] : memref<64x32xf32, #tpu.memory_space<vmem>>, vector<8x32xf32>
    tpu.vector_store %arg12[%226, %c0_105], %223 {strides = array<i32>} : memref<64x32xf32, #tpu.memory_space<vmem>>, vector<8x32xf32>,
    %c6_i32 = arith.constant 6 : i32
    %c8_i32_106 = arith.constant 8 : i32
    %228 = arith.muli %c6_i32, %c8_i32_106 : i32
    %229 = arith.index_cast %228 : i32 to index
    %c0_107 = arith.constant 0 : index
    %230 = vector.load %arg11[%229, %c0_107] : memref<64x128xf32, #tpu.memory_space<vmem>>, vector<8x128xf32>
    %c0_108 = arith.constant 0 : index
    %c0_109 = arith.constant 0 : index
    %231 = vector.load %arg13[%c0_108, %c0_109] : memref<8x32xf32, #tpu.memory_space<vmem>>, vector<8x32xf32>
    %c0_110 = arith.constant 0 : index
    %c0_111 = arith.constant 0 : index
    %232 = vector.load %arg14[%c0_110, %c0_111] : memref<8x32xf32, #tpu.memory_space<vmem>>, vector<8x32xf32>
    %cst_112 = arith.constant dense<0.000000e+00> : vector<8x128xf32>
    %233 = tpu.matmul %231, %11, %cst_112 {dimension_numbers = #tpu.dot_dimension_numbers<[1], [0], [0], [1], [0, 0, 1, 1], [], []>} : vector<8x32xf32>, vector<32x128xf32>, vector<8x128xf32> -> vector<8x128xf32>
    %234 = arith.addf %230, %233 : vector<8x128xf32>
    %235 = vector.extract_strided_slice %234 {offsets = [0, 0], sizes = [8, 32], strides = [1, 1]} : vector<8x128xf32> to vector<8x32xf32>
    %236 = arith.negf %235 : vector<8x32xf32>
    %237 = math.exp %236 : vector<8x32xf32>
    %cst_113 = arith.constant 1.000000e+00 : f32
    %238 = vector.broadcast %cst_113 : f32 to vector<8x32xf32>
    %239 = arith.addf %238, %237 : vector<8x32xf32>
    %240 = arith.divf %238, %239 : vector<8x32xf32>
    %241 = vector.extract_strided_slice %234 {offsets = [0, 32], sizes = [8, 32], strides = [1, 1]} : vector<8x128xf32> to vector<8x32xf32>
    %242 = arith.negf %241 : vector<8x32xf32>
    %243 = math.exp %242 : vector<8x32xf32>
    %cst_114 = arith.constant 1.000000e+00 : f32
    %244 = vector.broadcast %cst_114 : f32 to vector<8x32xf32>
    %245 = arith.addf %244, %243 : vector<8x32xf32>
    %246 = arith.divf %244, %245 : vector<8x32xf32>
    %247 = vector.extract_strided_slice %234 {offsets = [0, 64], sizes = [8, 32], strides = [1, 1]} : vector<8x128xf32> to vector<8x32xf32>
    %248 = math.tanh %247 : vector<8x32xf32>
    %249 = vector.extract_strided_slice %234 {offsets = [0, 96], sizes = [8, 32], strides = [1, 1]} : vector<8x128xf32> to vector<8x32xf32>
    %250 = arith.negf %249 : vector<8x32xf32>
    %251 = math.exp %250 : vector<8x32xf32>
    %cst_115 = arith.constant 1.000000e+00 : f32
    %252 = vector.broadcast %cst_115 : f32 to vector<8x32xf32>
    %253 = arith.addf %252, %251 : vector<8x32xf32>
    %254 = arith.divf %252, %253 : vector<8x32xf32>
    %255 = arith.mulf %246, %232 : vector<8x32xf32>
    %256 = arith.mulf %240, %248 : vector<8x32xf32>
    %257 = arith.addf %255, %256 : vector<8x32xf32>
    %258 = math.tanh %257 : vector<8x32xf32>
    %259 = arith.mulf %254, %258 : vector<8x32xf32>
    %c0_116 = arith.constant 0 : index
    %c0_117 = arith.constant 0 : index
    %260 = vector.load %arg13[%c0_116, %c0_117] : memref<8x32xf32, #tpu.memory_space<vmem>>, vector<8x32xf32>
    tpu.vector_store %arg13[%c0_116, %c0_117], %259 {strides = array<i32>} : memref<8x32xf32, #tpu.memory_space<vmem>>, vector<8x32xf32>,
    %c0_118 = arith.constant 0 : index
    %c0_119 = arith.constant 0 : index
    %261 = vector.load %arg14[%c0_118, %c0_119] : memref<8x32xf32, #tpu.memory_space<vmem>>, vector<8x32xf32>
    tpu.vector_store %arg14[%c0_118, %c0_119], %257 {strides = array<i32>} : memref<8x32xf32, #tpu.memory_space<vmem>>, vector<8x32xf32>,
    %262 = arith.index_cast %228 : i32 to index
    %c0_120 = arith.constant 0 : index
    %263 = vector.load %arg12[%262, %c0_120] : memref<64x32xf32, #tpu.memory_space<vmem>>, vector<8x32xf32>
    tpu.vector_store %arg12[%262, %c0_120], %259 {strides = array<i32>} : memref<64x32xf32, #tpu.memory_space<vmem>>, vector<8x32xf32>,
    %c7_i32 = arith.constant 7 : i32
    %c8_i32_121 = arith.constant 8 : i32
    %264 = arith.muli %c7_i32, %c8_i32_121 : i32
    %265 = arith.index_cast %264 : i32 to index
    %c0_122 = arith.constant 0 : index
    %266 = vector.load %arg11[%265, %c0_122] : memref<64x128xf32, #tpu.memory_space<vmem>>, vector<8x128xf32>
    %c0_123 = arith.constant 0 : index
    %c0_124 = arith.constant 0 : index
    %267 = vector.load %arg13[%c0_123, %c0_124] : memref<8x32xf32, #tpu.memory_space<vmem>>, vector<8x32xf32>
    %c0_125 = arith.constant 0 : index
    %c0_126 = arith.constant 0 : index
    %268 = vector.load %arg14[%c0_125, %c0_126] : memref<8x32xf32, #tpu.memory_space<vmem>>, vector<8x32xf32>
    %cst_127 = arith.constant dense<0.000000e+00> : vector<8x128xf32>
    %269 = tpu.matmul %267, %11, %cst_127 {dimension_numbers = #tpu.dot_dimension_numbers<[1], [0], [0], [1], [0, 0, 1, 1], [], []>} : vector<8x32xf32>, vector<32x128xf32>, vector<8x128xf32> -> vector<8x128xf32>
    %270 = arith.addf %266, %269 : vector<8x128xf32>
    %271 = vector.extract_strided_slice %270 {offsets = [0, 0], sizes = [8, 32], strides = [1, 1]} : vector<8x128xf32> to vector<8x32xf32>
    %272 = arith.negf %271 : vector<8x32xf32>
    %273 = math.exp %272 : vector<8x32xf32>
    %cst_128 = arith.constant 1.000000e+00 : f32
    %274 = vector.broadcast %cst_128 : f32 to vector<8x32xf32>
    %275 = arith.addf %274, %273 : vector<8x32xf32>
    %276 = arith.divf %274, %275 : vector<8x32xf32>
    %277 = vector.extract_strided_slice %270 {offsets = [0, 32], sizes = [8, 32], strides = [1, 1]} : vector<8x128xf32> to vector<8x32xf32>
    %278 = arith.negf %277 : vector<8x32xf32>
    %279 = math.exp %278 : vector<8x32xf32>
    %cst_129 = arith.constant 1.000000e+00 : f32
    %280 = vector.broadcast %cst_129 : f32 to vector<8x32xf32>
    %281 = arith.addf %280, %279 : vector<8x32xf32>
    %282 = arith.divf %280, %281 : vector<8x32xf32>
    %283 = vector.extract_strided_slice %270 {offsets = [0, 64], sizes = [8, 32], strides = [1, 1]} : vector<8x128xf32> to vector<8x32xf32>
    %284 = math.tanh %283 : vector<8x32xf32>
    %285 = vector.extract_strided_slice %270 {offsets = [0, 96], sizes = [8, 32], strides = [1, 1]} : vector<8x128xf32> to vector<8x32xf32>
    %286 = arith.negf %285 : vector<8x32xf32>
    %287 = math.exp %286 : vector<8x32xf32>
    %cst_130 = arith.constant 1.000000e+00 : f32
    %288 = vector.broadcast %cst_130 : f32 to vector<8x32xf32>
    %289 = arith.addf %288, %287 : vector<8x32xf32>
    %290 = arith.divf %288, %289 : vector<8x32xf32>
    %291 = arith.mulf %282, %268 : vector<8x32xf32>
    %292 = arith.mulf %276, %284 : vector<8x32xf32>
    %293 = arith.addf %291, %292 : vector<8x32xf32>
    %294 = math.tanh %293 : vector<8x32xf32>
    %295 = arith.mulf %290, %294 : vector<8x32xf32>
    %c0_131 = arith.constant 0 : index
    %c0_132 = arith.constant 0 : index
    %296 = vector.load %arg13[%c0_131, %c0_132] : memref<8x32xf32, #tpu.memory_space<vmem>>, vector<8x32xf32>
    tpu.vector_store %arg13[%c0_131, %c0_132], %295 {strides = array<i32>} : memref<8x32xf32, #tpu.memory_space<vmem>>, vector<8x32xf32>,
    %c0_133 = arith.constant 0 : index
    %c0_134 = arith.constant 0 : index
    %297 = vector.load %arg14[%c0_133, %c0_134] : memref<8x32xf32, #tpu.memory_space<vmem>>, vector<8x32xf32>
    tpu.vector_store %arg14[%c0_133, %c0_134], %293 {strides = array<i32>} : memref<8x32xf32, #tpu.memory_space<vmem>>, vector<8x32xf32>,
    %298 = arith.index_cast %264 : i32 to index
    %c0_135 = arith.constant 0 : index
    %299 = vector.load %arg12[%298, %c0_135] : memref<64x32xf32, #tpu.memory_space<vmem>>, vector<8x32xf32>
    tpu.vector_store %arg12[%298, %c0_135], %295 {strides = array<i32>} : memref<64x32xf32, #tpu.memory_space<vmem>>, vector<8x32xf32>,
    %c8_i32_136 = arith.constant 8 : i32
    %c0_137 = arith.constant 0 : index
    %c0_138 = arith.constant 0 : index
    %300 = vector.load %arg12[%c0_137, %c0_138] : memref<64x32xf32, #tpu.memory_space<vmem>>, vector<64x32xf32>
    %c0_139 = arith.constant 0 : index
    %c0_140 = arith.constant 0 : index
    %301 = vector.load %arg4[%c0_139, %c0_140] : memref<32x16xf32, #tpu.memory_space<vmem>>, vector<32x16xf32>
    %cst_141 = arith.constant dense<0.000000e+00> : vector<64x16xf32>
    %302 = tpu.matmul %300, %301, %cst_141 {dimension_numbers = #tpu.dot_dimension_numbers<[1], [0], [0], [1], [0, 0, 1, 1], [], []>} : vector<64x32xf32>, vector<32x16xf32>, vector<64x16xf32> -> vector<64x16xf32>
    %c0_142 = arith.constant 0 : index
    %c0_143 = arith.constant 0 : index
    %303 = vector.load %arg5[%c0_142, %c0_143] : memref<1x16xf32, #tpu.memory_space<vmem>>, vector<1x16xf32>
    %304 = vector.broadcast %303 : vector<1x16xf32> to vector<64x16xf32>
    %305 = arith.addf %302, %304 : vector<64x16xf32>
    %c0_144 = arith.constant 0 : index
    %c0_145 = arith.constant 0 : index
    %306 = vector.load %arg8[%c0_144, %c0_145] : memref<64x16xf32, #tpu.memory_space<vmem>>, vector<64x16xf32>
    tpu.vector_store %arg8[%c0_144, %c0_145], %305 {strides = array<i32>} : memref<64x16xf32, #tpu.memory_space<vmem>>, vector<64x16xf32>,
    %c0_146 = arith.constant 0 : index
    %c0_147 = arith.constant 0 : index
    %307 = vector.load %arg13[%c0_146, %c0_147] : memref<8x32xf32, #tpu.memory_space<vmem>>, vector<8x32xf32>
    %c0_148 = arith.constant 0 : index
    %c0_149 = arith.constant 0 : index
    %308 = vector.load %arg9[%c0_148, %c0_149] : memref<8x32xf32, #tpu.memory_space<vmem>>, vector<8x32xf32>
    tpu.vector_store %arg9[%c0_148, %c0_149], %307 {strides = array<i32>} : memref<8x32xf32, #tpu.memory_space<vmem>>, vector<8x32xf32>,
    %c0_150 = arith.constant 0 : index
    %c0_151 = arith.constant 0 : index
    %309 = vector.load %arg14[%c0_150, %c0_151] : memref<8x32xf32, #tpu.memory_space<vmem>>, vector<8x32xf32>
    %c0_152 = arith.constant 0 : index
    %c0_153 = arith.constant 0 : index
    %310 = vector.load %arg10[%c0_152, %c0_153] : memref<8x32xf32, #tpu.memory_space<vmem>>, vector<8x32xf32>
    tpu.vector_store %arg10[%c0_152, %c0_153], %309 {strides = array<i32>} : memref<8x32xf32, #tpu.memory_space<vmem>>, vector<8x32xf32>,
    return
  }
}

</mosaic_0001>

<llo_original>
// kernel: name_generator_forward.1
$region0: #{name_generator_forward.1}
  #allocation0 [shape = 'u32[]', space=smem, size = 0x4, offset = 0x4, fixed_abs, tag = 'smem constant byte address 0x4 - core index']
  #allocation1 [shape = 'u32[144,128]{1,0:T(1,128)}', space=vmem, size = 0x12000, scoped, tag = 'internal scratch']
  #allocation2 [shape = 'f32[64,128]{1,0:T(8,128)}', space=vmem, size = 0x8000, scoped, tag = 'scratch operand']
  #allocation3 [shape = 'f32[64,32]{1,0:T(8,128)}', space=vmem, size = 0x8000, scoped, tag = 'scratch operand']
  #allocation4 [shape = 'f32[8,32]{1,0:T(8,128)}', space=vmem, size = 0x1000, scoped, tag = 'scratch operand']
  #allocation5 [shape = 'f32[8,32]{1,0:T(8,128)}', space=vmem, size = 0x1000, scoped, tag = 'scratch operand']
  %s0 = inlined_call_operand.vmem [shape: f32[64,64], index: 0, kind: input, shape index: {}]
  %s1 = inlined_call_operand.vmem [shape: f32[64,128], index: 1, kind: input, shape index: {}]
  %s2 = inlined_call_operand.vmem [shape: f32[32,128], index: 2, kind: input, shape index: {}]
  %s3 = inlined_call_operand.vmem [shape: f32[1,128], index: 3, kind: input, shape index: {}]
  %s4 = inlined_call_operand.vmem [shape: f32[32,16], index: 4, kind: input, shape index: {}]
  %s5 = inlined_call_operand.vmem [shape: f32[1,16], index: 5, kind: input, shape index: {}]
  %s6 = inlined_call_operand.vmem [shape: f32[8,32], index: 6, kind: input, shape index: {}]
  %s7 = inlined_call_operand.vmem [shape: f32[8,32], index: 7, kind: input, shape index: {}]
  %s8 = inlined_call_operand.vmem [shape: f32[64,16], index: 8, kind: output, shape index: {0}]
  %s9 = inlined_call_operand.vmem [shape: f32[8,32], index: 9, kind: output, shape index: {1}]
  %s10 = inlined_call_operand.vmem [shape: f32[8,32], index: 10, kind: output, shape index: {2}]
  %11 = xla_tuple %s8, %s9, %s10
  %s12 = sld [smem:[#allocation0]]
  $region58: #{name_generator_forward.1} parent=0
    _
  %s14 = ssub.s32 1, %s12
  %s15 = scalar_select 0, %s14, %s12
  // Predicated region
  $region2: #{name_generator_forward.1} parent=0 // pred_check
    _
  $region3: #{name_generator_forward.1} parent=0 // pred_check_branch
    %17 = sbr.rel (0) target = $region5
  $region4: #{name_generator_forward.1} parent=0 // pred_region
    _
  $region5: #{name_generator_forward.1} parent=0 // pred_fallthru
    _
  // Predicated region
  $region6: #{name_generator_forward.1} parent=0 // pred_check
    _
  $region7: #{name_generator_forward.1} parent=0 // pred_check_branch
    %19 = sbr.rel (0) target = $region9
  $region8: #{name_generator_forward.1} parent=0 // pred_region
    _
  $region9: #{name_generator_forward.1} parent=0 // pred_fallthru
    _
  // Predicated region
  $region10: #{name_generator_forward.1} parent=0 // pred_check
    _
  $region11: #{name_generator_forward.1} parent=0 // pred_check_branch
    %21 = sbr.rel (0) target = $region13
  $region12: #{name_generator_forward.1} parent=0 // pred_region
    _
  $region13: #{name_generator_forward.1} parent=0 // pred_fallthru
    _
  // Predicated region
  $region14: #{name_generator_forward.1} parent=0 // pred_check
    _
  $region15: #{name_generator_forward.1} parent=0 // pred_check_branch
    %23 = sbr.rel (0) target = $region17
  $region16: #{name_generator_forward.1} parent=0 // pred_region
    _
  $region17: #{name_generator_forward.1} parent=0 // pred_fallthru
    _
  // Predicated region
  $region18: #{name_generator_forward.1} parent=0 // pred_check
    _
  $region19: #{name_generator_forward.1} parent=0 // pred_check_branch
    %25 = sbr.rel (0) target = $region21
  $region20: #{name_generator_forward.1} parent=0 // pred_region
    _
  $region21: #{name_generator_forward.1} parent=0 // pred_fallthru
    _
  // Predicated region
  $region22: #{name_generator_forward.1} parent=0 // pred_check
    _
  $region23: #{name_generator_forward.1} parent=0 // pred_check_branch
    %27 = sbr.rel (0) target = $region25
  $region24: #{name_generator_forward.1} parent=0 // pred_region
    _
  $region25: #{name_generator_forward.1} parent=0 // pred_fallthru
    _
  // Predicated region
  $region26: #{name_generator_forward.1} parent=0 // pred_check
    _
  $region27: #{name_generator_forward.1} parent=0 // pred_check_branch
    %29 = sbr.rel (0) target = $region29
  $region28: #{name_generator_forward.1} parent=0 // pred_region
    _
  $region29: #{name_generator_forward.1} parent=0 // pred_fallthru
    _
  // Predicated region
  $region30: #{name_generator_forward.1} parent=0 // pred_check
    _
  $region31: #{name_generator_forward.1} parent=0 // pred_check_branch
    %31 = sbr.rel (0) target = $region33
  $region32: #{name_generator_forward.1} parent=0 // pred_region
    _
  $region33: #{name_generator_forward.1} parent=0 // pred_fallthru
    _
  %v32 = vld [vmem:[%s0] sm:$0xff]
  %v33 = vld [vmem:[%s0 + $0x8] sm:$0xff]
  %v34 = vld [vmem:[%s0 + $0x10] sm:$0xff]
  %v35 = vld [vmem:[%s0 + $0x18] sm:$0xff]
  %v36 = vld [vmem:[%s0 + $0x20] sm:$0xff]
  %v37 = vld [vmem:[%s0 + $0x28] sm:$0xff]
  %v38 = vld [vmem:[%s0 + $0x30] sm:$0xff]
  %v39 = vld [vmem:[%s0 + $0x38] sm:$0xff]
  %v40 = vld [vmem:[%s1] sm:$0xff]
  %v41 = vld [vmem:[%s1 + $0x8] sm:$0xff]
  %v42 = vld [vmem:[%s1 + $0x10] sm:$0xff]
  %v43 = vld [vmem:[%s1 + $0x18] sm:$0xff]
  %v44 = vld [vmem:[%s1 + $0x20] sm:$0xff]
  %v45 = vld [vmem:[%s1 + $0x28] sm:$0xff]
  %v46 = vld [vmem:[%s1 + $0x30] sm:$0xff]
  %v47 = vld [vmem:[%s1 + $0x38] sm:$0xff]
  %v48 = vld [vmem:[%s3] sm:$0x1]
  %v50 = vlaneseq
  %v51 = vshrl.u32 %v50, 7
  %v52 = vsub.s32 0, %v51
  %v53 = vrot.slane %v48, %v52
  %vm55 = vcmask 523264
  %v57 = vsel %vm55, %v32, 0
  %v60 = vsel %vm55, %v33, 0
  %v63 = vsel %vm55, %v34, 0
  %v66 = vsel %vm55, %v35, 0
  %v69 = vsel %vm55, %v36, 0
  %v72 = vsel %vm55, %v37, 0
  %v75 = vsel %vm55, %v38, 0
  %v78 = vsel %vm55, %v39, 0
  %80 = vmatprep.subr.mxu0 0.0
  %81 = vmatpush1.msra.mxu0 %v40
  %82 = vmatprep.subr.mxu0 0.0
  %83 = vmatpush1.msra.mxu0 %v41
  %84 = vmatprep.subr.mxu0 0.0
  %85 = vmatpush1.msra.mxu0 %v42
  %86 = vmatprep.subr.mxu0 0.0
  %87 = vmatpush1.msra.mxu0 %v43
  %88 = vmatprep.subr.mxu0 0.0
  %89 = vmatpush1.msra.mxu0 %v44
  %90 = vmatprep.subr.mxu0 0.0
  %91 = vmatpush1.msra.mxu0 %v45
  %92 = vmatprep.subr.mxu0 0.0
  %93 = vmatpush1.msra.mxu0 %v46
  %94 = vmatprep.subr.mxu0 0.0
  %95 = vmatpush1.msra.mxu0 %v47
  %96 = vmatprep.subr.mxu0 0.0
  %97 = vmatpush1.msra.mxu0 0.0
  %98 = vmatprep.subr.mxu0 0.0
  %99 = vmatpush1.msra.mxu0 0.0
  %100 = vmatprep.subr.mxu0 0.0
  %101 = vmatpush1.msra.mxu0 0.0
  %102 = vmatprep.subr.mxu0 0.0
  %103 = vmatpush1.msra.mxu0 0.0
  %104 = vmatprep.subr.mxu0 0.0
  %105 = vmatpush1.msra.mxu0 0.0
  %106 = vmatprep.subr.mxu0 0.0
  %107 = vmatpush1.msra.mxu0 0.0
  %108 = vmatprep.subr.mxu0 0.0
  %109 = vmatpush1.msra.mxu0 0.0
  %110 = vmatprep.subr.mxu0 0.0
  %111 = vmatpush1.msra.mxu0 0.0
  %112 = vmatprep.subr.mxu0 0.0
  %113 = vmatpush1.msra.mxu0 0.0
  %114 = vmatprep.subr.mxu0 0.0
  %115 = vmatpush1.msra.mxu0 0.0
  %116 = vmatprep.subr.mxu0 0.0
  %117 = vmatpush1.msra.mxu0 0.0
  %118 = vmatprep.subr.mxu0 0.0
  %119 = vmatpush1.msra.mxu0 0.0
  %120 = vmatprep.subr.mxu0 0.0
  %121 = vmatpush1.msra.mxu0 0.0
  %122 = vmatprep.subr.mxu0 0.0
  %123 = vmatpush1.msra.mxu0 0.0
  %124 = vmatprep.subr.mxu0 0.0
  %125 = vmatpush1.msra.mxu0 0.0
  %126 = vmatprep.subr.mxu0 0.0
  %127 = vmatpush1.msra.mxu0 0.0
  %128 = vmatprep.subr.mxu0 0.0
  %129 = vmatpush1.msra.mxu0 0.0
  %130 = vmatprep.subr.mxu0 0.0
  %131 = vmatpush1.msra.mxu0 0.0
  %132 = vmatprep.subr.mxu0 0.0
  %133 = vmatpush1.msra.mxu0 0.0
  %134 = vmatprep.subr.mxu0 0.0
  %135 = vmatpush1.msra.mxu0 0.0
  %136 = vmatprep.subr.mxu0 0.0
  %137 = vmatpush1.msra.mxu0 0.0
  %138 = vmatprep.subr.mxu0 0.0
  %139 = vmatpush1.msra.mxu0 0.0
  %140 = vmatprep.subr.mxu0 0.0
  %141 = vmatpush1.msra.mxu0 0.0
  %142 = vmatprep.subr.mxu0 0.0
  %143 = vmatpush1.msra.mxu0 0.0
  %144 = vmatprep.mubr.f32.mxu0 0.0
  %145 = vmatmul.mubr.f32.gmra.mrb[0].mxu0 %v57
  %v146 = vpop.f32.mrb[0].mxu0
  %v147 = vadd.f32 %v53, %v146
  %v148 = vpop.f32.mrb[0].mxu0
  %149 = vmatprep.mubr.f32.mxu0 0.0
  %150 = vmatmul.mubr.f32.gmra.mrb[0].mxu0 %v60
  %v151 = vpop.f32.mrb[0].mxu0
  %v152 = vadd.f32 %v53, %v151
  %v153 = vpop.f32.mrb[0].mxu0
  %154 = vmatprep.mubr.f32.mxu0 0.0
  %155 = vmatmul.mubr.f32.gmra.mrb[0].mxu0 %v63
  %v156 = vpop.f32.mrb[0].mxu0
  %v157 = vadd.f32 %v53, %v156
  %v158 = vpop.f32.mrb[0].mxu0
  %159 = vmatprep.mubr.f32.mxu0 0.0
  %160 = vmatmul.mubr.f32.gmra.mrb[0].mxu0 %v66
  %v161 = vpop.f32.mrb[0].mxu0
  %v162 = vadd.f32 %v53, %v161
  %v163 = vpop.f32.mrb[0].mxu0
  %164 = vmatprep.mubr.f32.mxu0 0.0
  %165 = vmatmul.mubr.f32.gmra.mrb[0].mxu0 %v69
  %v166 = vpop.f32.mrb[0].mxu0
  %v167 = vadd.f32 %v53, %v166
  %v168 = vpop.f32.mrb[0].mxu0
  %169 = vmatprep.mubr.f32.mxu0 0.0
  %170 = vmatmul.mubr.f32.gmra.mrb[0].mxu0 %v72
  %v171 = vpop.f32.mrb[0].mxu0
  %v172 = vadd.f32 %v53, %v171
  %v173 = vpop.f32.mrb[0].mxu0
  %174 = vmatprep.mubr.f32.mxu0 0.0
  %175 = vmatmul.mubr.f32.gmra.mrb[0].mxu0 %v75
  %v176 = vpop.f32.mrb[0].mxu0
  %v177 = vadd.f32 %v53, %v176
  %v178 = vpop.f32.mrb[0].mxu0
  %179 = vmatprep.mubr.f32.mxu0 0.0
  %180 = vmatmul.mubr.f32.gmra.mrb[0].mxu0 %v78
  %v181 = vpop.f32.mrb[0].mxu0
  %v182 = vadd.f32 %v53, %v181
  %v183 = vpop.f32.mrb[0].mxu0
  %184 = vdwg.mxu0
  %185 = vst [vmem:[#allocation2] sm:$0xff] %v147
  %186 = vst [vmem:[#allocation2 + $0x8] sm:$0xff] %v152
  %187 = vst [vmem:[#allocation2 + $0x10] sm:$0xff] %v157
  %188 = vst [vmem:[#allocation2 + $0x18] sm:$0xff] %v162
  %189 = vst [vmem:[#allocation2 + $0x20] sm:$0xff] %v167
  %190 = vst [vmem:[#allocation2 + $0x28] sm:$0xff] %v172
  %191 = vst [vmem:[#allocation2 + $0x30] sm:$0xff] %v177
  %192 = vst [vmem:[#allocation2 + $0x38] sm:$0xff] %v182
  %v193 = vld [vmem:[%s6] sm:$0xff]
  %vm194 = vcmask 261120
  %195 = vst.msk [vmem:[#allocation4] sm:$0xff] %vm194, %v193
  %v196 = vld [vmem:[%s7] sm:$0xff]
  %197 = vst.msk [vmem:[#allocation5] sm:$0xff] %vm194, %v196
  %v198 = vld [vmem:[%s2] sm:$0xff]
  %v199 = vld [vmem:[%s2 + $0x8] sm:$0xff]
  %v200 = vld [vmem:[%s2 + $0x10] sm:$0xff]
  %v201 = vld [vmem:[%s2 + $0x18] sm:$0xff]
  %v202 = vld [vmem:[#allocation2] sm:$0xff]
  %v203 = vld [vmem:[#allocation4] sm:$0xff]
  %v204 = vld [vmem:[#allocation5] sm:$0xff]
  %v206 = vsel %vm194, %v203, 0
  %208 = vmatprep.subr.mxu0 0.0
  %209 = vmatpush1.msra.mxu0 %v198
  %210 = vmatprep.subr.mxu0 0.0
  %211 = vmatpush1.msra.mxu0 %v199
  %212 = vmatprep.subr.mxu0 0.0
  %213 = vmatpush1.msra.mxu0 %v200
  %214 = vmatprep.subr.mxu0 0.0
  %215 = vmatpush1.msra.mxu0 %v201
  %216 = vmatprep.subr.mxu0 0.0
  %217 = vmatpush1.msra.mxu0 0.0
  %218 = vmatprep.subr.mxu0 0.0
  %219 = vmatpush1.msra.mxu0 0.0
  %220 = vmatprep.subr.mxu0 0.0
  %221 = vmatpush1.msra.mxu0 0.0
  %222 = vmatprep.subr.mxu0 0.0
  %223 = vmatpush1.msra.mxu0 0.0
  %224 = vmatprep.subr.mxu0 0.0
  %225 = vmatpush1.msra.mxu0 0.0
  %226 = vmatprep.subr.mxu0 0.0
  %227 = vmatpush1.msra.mxu0 0.0
  %228 = vmatprep.subr.mxu0 0.0
  %229 = vmatpush1.msra.mxu0 0.0
  %230 = vmatprep.subr.mxu0 0.0
  %231 = vmatpush1.msra.mxu0 0.0
  %232 = vmatprep.subr.mxu0 0.0
  %233 = vmatpush1.msra.mxu0 0.0
  %234 = vmatprep.subr.mxu0 0.0
  %235 = vmatpush1.msra.mxu0 0.0
  %236 = vmatprep.subr.mxu0 0.0
  %237 = vmatpush1.msra.mxu0 0.0
  %238 = vmatprep.subr.mxu0 0.0
  %239 = vmatpush1.msra.mxu0 0.0
  %240 = vmatprep.subr.mxu0 0.0
  %241 = vmatpush1.msra.mxu0 0.0
  %242 = vmatprep.subr.mxu0 0.0
  %243 = vmatpush1.msra.mxu0 0.0
  %244 = vmatprep.subr.mxu0 0.0
  %245 = vmatpush1.msra.mxu0 0.0
  %246 = vmatprep.subr.mxu0 0.0
  %247 = vmatpush1.msra.mxu0 0.0
  %248 = vmatprep.subr.mxu0 0.0
  %249 = vmatpush1.msra.mxu0 0.0
  %250 = vmatprep.subr.mxu0 0.0
  %251 = vmatpush1.msra.mxu0 0.0
  %252 = vmatprep.subr.mxu0 0.0
  %253 = vmatpush1.msra.mxu0 0.0
  %254 = vmatprep.subr.mxu0 0.0
  %255 = vmatpush1.msra.mxu0 0.0
  %256 = vmatprep.subr.mxu0 0.0
  %257 = vmatpush1.msra.mxu0 0.0
  %258 = vmatprep.subr.mxu0 0.0
  %259 = vmatpush1.msra.mxu0 0.0
  %260 = vmatprep.subr.mxu0 0.0
  %261 = vmatpush1.msra.mxu0 0.0
  %262 = vmatprep.subr.mxu0 0.0
  %263 = vmatpush1.msra.mxu0 0.0
  %264 = vmatprep.subr.mxu0 0.0
  %265 = vmatpush1.msra.mxu0 0.0
  %266 = vmatprep.subr.mxu0 0.0
  %267 = vmatpush1.msra.mxu0 0.0
  %268 = vmatprep.subr.mxu0 0.0
  %269 = vmatpush1.msra.mxu0 0.0
  %270 = vmatprep.subr.mxu0 0.0
  %271 = vmatpush1.msra.mxu0 0.0
  %272 = vmatprep.mubr.f32.mxu0 0.0
  %273 = vmatmul.mubr.f32.gmra.mrb[0].mxu0 %v206
  %v274 = vpop.f32.mrb[0].mxu0
  %v275 = vadd.f32 0.0, %v274
  %v276 = vpop.f32.mrb[0].mxu0
  %277 = vdwg.mxu0
  %v278 = vadd.f32 %v202, %v275
  %v279 = vxor.u32 %v278, 2147483648
  %v280 = vmul.f32 %v279, 1.442695
  %v281 = vpow.pop %v280
  %v282 = vadd.f32 %v281, 1.0
  %v283 = vrcp.pop %v282
  %v284 = vmul.f32 1.0, %v283
  %v285 = vtanh.pop %v278
  %287 = vrot.lane.b32.xlu0 %v204, 32
  %v288 = vpop.permute.xlu0 %287
  %v290 = vmul.f32 %v284, %v288
  %292 = vrot.lane.b32.xlu0 %v285, 64
  %v293 = vpop.permute.xlu0 %292
  %v295 = vmul.f32 %v284, %v293
  %297 = vrot.lane.b32.xlu0 %v295, 32
  %v298 = vpop.permute.xlu0 %297
  %v300 = vadd.f32 %v290, %v298
  %v301 = vtanh.pop %v300
  %303 = vrot.lane.b32.xlu0 %v301, 64
  %v304 = vpop.permute.xlu0 %303
  %v306 = vmul.f32 %v284, %v304
  %308 = vrot.lane.b32.xlu0 %v306, 32
  %v309 = vpop.permute.xlu0 %308
  %311 = vst.msk [vmem:[#allocation4] sm:$0xff] %vm194, %v309
  %313 = vrot.lane.b32.xlu0 %v300, 96
  %v314 = vpop.permute.xlu0 %313
  %316 = vst.msk [vmem:[#allocation5] sm:$0xff] %vm194, %v314
  %317 = vst.msk [vmem:[#allocation3] sm:$0xff] %vm194, %v309
  %v318 = vld [vmem:[#allocation2 + $0x8] sm:$0xff]
  %v319 = vld [vmem:[#allocation4] sm:$0xff]
  %v320 = vld [vmem:[#allocation5] sm:$0xff]
  %v322 = vsel %vm194, %v319, 0
  %324 = vmatprep.subr.mxu0 0.0
  %325 = vmatpush1.msra.mxu0 %v198
  %326 = vmatprep.subr.mxu0 0.0
  %327 = vmatpush1.msra.mxu0 %v199
  %328 = vmatprep.subr.mxu0 0.0
  %329 = vmatpush1.msra.mxu0 %v200
  %330 = vmatprep.subr.mxu0 0.0
  %331 = vmatpush1.msra.mxu0 %v201
  %332 = vmatprep.subr.mxu0 0.0
  %333 = vmatpush1.msra.mxu0 0.0
  %334 = vmatprep.subr.mxu0 0.0
  %335 = vmatpush1.msra.mxu0 0.0
  %336 = vmatprep.subr.mxu0 0.0
  %337 = vmatpush1.msra.mxu0 0.0
  %338 = vmatprep.subr.mxu0 0.0
  %339 = vmatpush1.msra.mxu0 0.0
  %340 = vmatprep.subr.mxu0 0.0
  %341 = vmatpush1.msra.mxu0 0.0
  %342 = vmatprep.subr.mxu0 0.0
  %343 = vmatpush1.msra.mxu0 0.0
  %344 = vmatprep.subr.mxu0 0.0
  %345 = vmatpush1.msra.mxu0 0.0
  %346 = vmatprep.subr.mxu0 0.0
  %347 = vmatpush1.msra.mxu0 0.0
  %348 = vmatprep.subr.mxu0 0.0
  %349 = vmatpush1.msra.mxu0 0.0
  %350 = vmatprep.subr.mxu0 0.0
  %351 = vmatpush1.msra.mxu0 0.0
  %352 = vmatprep.subr.mxu0 0.0
  %353 = vmatpush1.msra.mxu0 0.0
  %354 = vmatprep.subr.mxu0 0.0
  %355 = vmatpush1.msra.mxu0 0.0
  %356 = vmatprep.subr.mxu0 0.0
  %357 = vmatpush1.msra.mxu0 0.0
  %358 = vmatprep.subr.mxu0 0.0
  %359 = vmatpush1.msra.mxu0 0.0
  %360 = vmatprep.subr.mxu0 0.0
  %361 = vmatpush1.msra.mxu0 0.0
  %362 = vmatprep.subr.mxu0 0.0
  %363 = vmatpush1.msra.mxu0 0.0
  %364 = vmatprep.subr.mxu0 0.0
  %365 = vmatpush1.msra.mxu0 0.0
  %366 = vmatprep.subr.mxu0 0.0
  %367 = vmatpush1.msra.mxu0 0.0
  %368 = vmatprep.subr.mxu0 0.0
  %369 = vmatpush1.msra.mxu0 0.0
  %370 = vmatprep.subr.mxu0 0.0
  %371 = vmatpush1.msra.mxu0 0.0
  %372 = vmatprep.subr.mxu0 0.0
  %373 = vmatpush1.msra.mxu0 0.0
  %374 = vmatprep.subr.mxu0 0.0
  %375 = vmatpush1.msra.mxu0 0.0
  %376 = vmatprep.subr.mxu0 0.0
  %377 = vmatpush1.msra.mxu0 0.0
  %378 = vmatprep.subr.mxu0 0.0
  %379 = vmatpush1.msra.mxu0 0.0
  %380 = vmatprep.subr.mxu0 0.0
  %381 = vmatpush1.msra.mxu0 0.0
  %382 = vmatprep.subr.mxu0 0.0
  %383 = vmatpush1.msra.mxu0 0.0
  %384 = vmatprep.subr.mxu0 0.0
  %385 = vmatpush1.msra.mxu0 0.0
  %386 = vmatprep.subr.mxu0 0.0
  %387 = vmatpush1.msra.mxu0 0.0
  %388 = vmatprep.mubr.f32.mxu0 0.0
  %389 = vmatmul.mubr.f32.gmra.mrb[0].mxu0 %v322
  %v390 = vpop.f32.mrb[0].mxu0
  %v391 = vadd.f32 0.0, %v390
  %v392 = vpop.f32.mrb[0].mxu0
  %393 = vdwg.mxu0
  %v394 = vadd.f32 %v318, %v391
  %v395 = vxor.u32 %v394, 2147483648
  %v396 = vmul.f32 %v395, 1.442695
  %v397 = vpow.pop %v396
  %v398 = vadd.f32 %v397, 1.0
  %v399 = vrcp.pop %v398
  %v400 = vmul.f32 1.0, %v399
  %v401 = vtanh.pop %v394
  %403 = vrot.lane.b32.xlu0 %v320, 32
  %v404 = vpop.permute.xlu0 %403
  %v406 = vmul.f32 %v400, %v404
  %408 = vrot.lane.b32.xlu0 %v401, 64
  %v409 = vpop.permute.xlu0 %408
  %v411 = vmul.f32 %v400, %v409
  %413 = vrot.lane.b32.xlu0 %v411, 32
  %v414 = vpop.permute.xlu0 %413
  %v416 = vadd.f32 %v406, %v414
  %v417 = vtanh.pop %v416
  %419 = vrot.lane.b32.xlu0 %v417, 64
  %v420 = vpop.permute.xlu0 %419
  %v422 = vmul.f32 %v400, %v420
  %424 = vrot.lane.b32.xlu0 %v422, 32
  %v425 = vpop.permute.xlu0 %424
  %427 = vst.msk [vmem:[#allocation4] sm:$0xff] %vm194, %v425
  %429 = vrot.lane.b32.xlu0 %v416, 96
  %v430 = vpop.permute.xlu0 %429
  %432 = vst.msk [vmem:[#allocation5] sm:$0xff] %vm194, %v430
  %433 = vst.msk [vmem:[#allocation3 + $0x8] sm:$0xff] %vm194, %v425
  %v434 = vld [vmem:[#allocation2 + $0x10] sm:$0xff]
  %v435 = vld [vmem:[#allocation4] sm:$0xff]
  %v436 = vld [vmem:[#allocation5] sm:$0xff]
  %v438 = vsel %vm194, %v435, 0
  %440 = vmatprep.subr.mxu0 0.0
  %441 = vmatpush1.msra.mxu0 %v198
  %442 = vmatprep.subr.mxu0 0.0
  %443 = vmatpush1.msra.mxu0 %v199
  %444 = vmatprep.subr.mxu0 0.0
  %445 = vmatpush1.msra.mxu0 %v200
  %446 = vmatprep.subr.mxu0 0.0
  %447 = vmatpush1.msra.mxu0 %v201
  %448 = vmatprep.subr.mxu0 0.0
  %449 = vmatpush1.msra.mxu0 0.0
  %450 = vmatprep.subr.mxu0 0.0
  %451 = vmatpush1.msra.mxu0 0.0
  %452 = vmatprep.subr.mxu0 0.0
  %453 = vmatpush1.msra.mxu0 0.0
  %454 = vmatprep.subr.mxu0 0.0
  %455 = vmatpush1.msra.mxu0 0.0
  %456 = vmatprep.subr.mxu0 0.0
  %457 = vmatpush1.msra.mxu0 0.0
  %458 = vmatprep.subr.mxu0 0.0
  %459 = vmatpush1.msra.mxu0 0.0
  %460 = vmatprep.subr.mxu0 0.0
  %461 = vmatpush1.msra.mxu0 0.0
  %462 = vmatprep.subr.mxu0 0.0
  %463 = vmatpush1.msra.mxu0 0.0
  %464 = vmatprep.subr.mxu0 0.0
  %465 = vmatpush1.msra.mxu0 0.0
  %466 = vmatprep.subr.mxu0 0.0
  %467 = vmatpush1.msra.mxu0 0.0
  %468 = vmatprep.subr.mxu0 0.0
  %469 = vmatpush1.msra.mxu0 0.0
  %470 = vmatprep.subr.mxu0 0.0
  %471 = vmatpush1.msra.mxu0 0.0
  %472 = vmatprep.subr.mxu0 0.0
  %473 = vmatpush1.msra.mxu0 0.0
  %474 = vmatprep.subr.mxu0 0.0
  %475 = vmatpush1.msra.mxu0 0.0
  %476 = vmatprep.subr.mxu0 0.0
  %477 = vmatpush1.msra.mxu0 0.0
  %478 = vmatprep.subr.mxu0 0.0
  %479 = vmatpush1.msra.mxu0 0.0
  %480 = vmatprep.subr.mxu0 0.0
  %481 = vmatpush1.msra.mxu0 0.0
  %482 = vmatprep.subr.mxu0 0.0
  %483 = vmatpush1.msra.mxu0 0.0
  %484 = vmatprep.subr.mxu0 0.0
  %485 = vmatpush1.msra.mxu0 0.0
  %486 = vmatprep.subr.mxu0 0.0
  %487 = vmatpush1.msra.mxu0 0.0
  %488 = vmatprep.subr.mxu0 0.0
  %489 = vmatpush1.msra.mxu0 0.0
  %490 = vmatprep.subr.mxu0 0.0
  %491 = vmatpush1.msra.mxu0 0.0
  %492 = vmatprep.subr.mxu0 0.0
  %493 = vmatpush1.msra.mxu0 0.0
  %494 = vmatprep.subr.mxu0 0.0
  %495 = vmatpush1.msra.mxu0 0.0
  %496 = vmatprep.subr.mxu0 0.0
  %497 = vmatpush1.msra.mxu0 0.0
  %498 = vmatprep.subr.mxu0 0.0
  %499 = vmatpush1.msra.mxu0 0.0
  %500 = vmatprep.subr.mxu0 0.0
  %501 = vmatpush1.msra.mxu0 0.0
  %502 = vmatprep.subr.mxu0 0.0
  %503 = vmatpush1.msra.mxu0 0.0
  %504 = vmatprep.mubr.f32.mxu0 0.0
  %505 = vmatmul.mubr.f32.gmra.mrb[0].mxu0 %v438
  %v506 = vpop.f32.mrb[0].mxu0
  %v507 = vadd.f32 0.0, %v506
  %v508 = vpop.f32.mrb[0].mxu0
  %509 = vdwg.mxu0
  %v510 = vadd.f32 %v434, %v507
  %v511 = vxor.u32 %v510, 2147483648
  %v512 = vmul.f32 %v511, 1.442695
  %v513 = vpow.pop %v512
  %v514 = vadd.f32 %v513, 1.0
  %v515 = vrcp.pop %v514
  %v516 = vmul.f32 1.0, %v515
  %v517 = vtanh.pop %v510
  %519 = vrot.lane.b32.xlu0 %v436, 32
  %v520 = vpop.permute.xlu0 %519
  %v522 = vmul.f32 %v516, %v520
  %524 = vrot.lane.b32.xlu0 %v517, 64
  %v525 = vpop.permute.xlu0 %524
  %v527 = vmul.f32 %v516, %v525
  %529 = vrot.lane.b32.xlu0 %v527, 32
  %v530 = vpop.permute.xlu0 %529
  %v532 = vadd.f32 %v522, %v530
  %v533 = vtanh.pop %v532
  %535 = vrot.lane.b32.xlu0 %v533, 64
  %v536 = vpop.permute.xlu0 %535
  %v538 = vmul.f32 %v516, %v536
  %540 = vrot.lane.b32.xlu0 %v538, 32
  %v541 = vpop.permute.xlu0 %540
  %543 = vst.msk [vmem:[#allocation4] sm:$0xff] %vm194, %v541
  %545 = vrot.lane.b32.xlu0 %v532, 96
  %v546 = vpop.permute.xlu0 %545
  %548 = vst.msk [vmem:[#allocation5] sm:$0xff] %vm194, %v546
  %549 = vst.msk [vmem:[#allocation3 + $0x10] sm:$0xff] %vm194, %v541
  %v550 = vld [vmem:[#allocation2 + $0x18] sm:$0xff]
  %v551 = vld [vmem:[#allocation4] sm:$0xff]
  %v552 = vld [vmem:[#allocation5] sm:$0xff]
  %v554 = vsel %vm194, %v551, 0
  %556 = vmatprep.subr.mxu0 0.0
  %557 = vmatpush1.msra.mxu0 %v198
  %558 = vmatprep.subr.mxu0 0.0
  %559 = vmatpush1.msra.mxu0 %v199
  %560 = vmatprep.subr.mxu0 0.0
  %561 = vmatpush1.msra.mxu0 %v200
  %562 = vmatprep.subr.mxu0 0.0
  %563 = vmatpush1.msra.mxu0 %v201
  %564 = vmatprep.subr.mxu0 0.0
  %565 = vmatpush1.msra.mxu0 0.0
  %566 = vmatprep.subr.mxu0 0.0
  %567 = vmatpush1.msra.mxu0 0.0
  %568 = vmatprep.subr.mxu0 0.0
  %569 = vmatpush1.msra.mxu0 0.0
  %570 = vmatprep.subr.mxu0 0.0
  %571 = vmatpush1.msra.mxu0 0.0
  %572 = vmatprep.subr.mxu0 0.0
  %573 = vmatpush1.msra.mxu0 0.0
  %574 = vmatprep.subr.mxu0 0.0
  %575 = vmatpush1.msra.mxu0 0.0
  %576 = vmatprep.subr.mxu0 0.0
  %577 = vmatpush1.msra.mxu0 0.0
  %578 = vmatprep.subr.mxu0 0.0
  %579 = vmatpush1.msra.mxu0 0.0
  %580 = vmatprep.subr.mxu0 0.0
  %581 = vmatpush1.msra.mxu0 0.0
  %582 = vmatprep.subr.mxu0 0.0
  %583 = vmatpush1.msra.mxu0 0.0
  %584 = vmatprep.subr.mxu0 0.0
  %585 = vmatpush1.msra.mxu0 0.0
  %586 = vmatprep.subr.mxu0 0.0
  %587 = vmatpush1.msra.mxu0 0.0
  %588 = vmatprep.subr.mxu0 0.0
  %589 = vmatpush1.msra.mxu0 0.0
  %590 = vmatprep.subr.mxu0 0.0
  %591 = vmatpush1.msra.mxu0 0.0
  %592 = vmatprep.subr.mxu0 0.0
  %593 = vmatpush1.msra.mxu0 0.0
  %594 = vmatprep.subr.mxu0 0.0
  %595 = vmatpush1.msra.mxu0 0.0
  %596 = vmatprep.subr.mxu0 0.0
  %597 = vmatpush1.msra.mxu0 0.0
  %598 = vmatprep.subr.mxu0 0.0
  %599 = vmatpush1.msra.mxu0 0.0
  %600 = vmatprep.subr.mxu0 0.0
  %601 = vmatpush1.msra.mxu0 0.0
  %602 = vmatprep.subr.mxu0 0.0
  %603 = vmatpush1.msra.mxu0 0.0
  %604 = vmatprep.subr.mxu0 0.0
  %605 = vmatpush1.msra.mxu0 0.0
  %606 = vmatprep.subr.mxu0 0.0
  %607 = vmatpush1.msra.mxu0 0.0
  %608 = vmatprep.subr.mxu0 0.0
  %609 = vmatpush1.msra.mxu0 0.0
  %610 = vmatprep.subr.mxu0 0.0
  %611 = vmatpush1.msra.mxu0 0.0
  %612 = vmatprep.subr.mxu0 0.0
  %613 = vmatpush1.msra.mxu0 0.0
  %614 = vmatprep.subr.mxu0 0.0
  %615 = vmatpush1.msra.mxu0 0.0
  %616 = vmatprep.subr.mxu0 0.0
  %617 = vmatpush1.msra.mxu0 0.0
  %618 = vmatprep.subr.mxu0 0.0
  %619 = vmatpush1.msra.mxu0 0.0
  %620 = vmatprep.mubr.f32.mxu0 0.0
  %621 = vmatmul.mubr.f32.gmra.mrb[0].mxu0 %v554
  %v622 = vpop.f32.mrb[0].mxu0
  %v623 = vadd.f32 0.0, %v622
  %v624 = vpop.f32.mrb[0].mxu0
  %625 = vdwg.mxu0
  %v626 = vadd.f32 %v550, %v623
  %v627 = vxor.u32 %v626, 2147483648
  %v628 = vmul.f32 %v627, 1.442695
  %v629 = vpow.pop %v628
  %v630 = vadd.f32 %v629, 1.0
  %v631 = vrcp.pop %v630
  %v632 = vmul.f32 1.0, %v631
  %v633 = vtanh.pop %v626
  %635 = vrot.lane.b32.xlu0 %v552, 32
  %v636 = vpop.permute.xlu0 %635
  %v638 = vmul.f32 %v632, %v636
  %640 = vrot.lane.b32.xlu0 %v633, 64
  %v641 = vpop.permute.xlu0 %640
  %v643 = vmul.f32 %v632, %v641
  %645 = vrot.lane.b32.xlu0 %v643, 32
  %v646 = vpop.permute.xlu0 %645
  %v648 = vadd.f32 %v638, %v646
  %v649 = vtanh.pop %v648
  %651 = vrot.lane.b32.xlu0 %v649, 64
  %v652 = vpop.permute.xlu0 %651
  %v654 = vmul.f32 %v632, %v652
  %656 = vrot.lane.b32.xlu0 %v654, 32
  %v657 = vpop.permute.xlu0 %656
  %659 = vst.msk [vmem:[#allocation4] sm:$0xff] %vm194, %v657
  %661 = vrot.lane.b32.xlu0 %v648, 96
  %v662 = vpop.permute.xlu0 %661
  %664 = vst.msk [vmem:[#allocation5] sm:$0xff] %vm194, %v662
  %665 = vst.msk [vmem:[#allocation3 + $0x18] sm:$0xff] %vm194, %v657
  %v666 = vld [vmem:[#allocation2 + $0x20] sm:$0xff]
  %v667 = vld [vmem:[#allocation4] sm:$0xff]
  %v668 = vld [vmem:[#allocation5] sm:$0xff]
  %v670 = vsel %vm194, %v667, 0
  %672 = vmatprep.subr.mxu0 0.0
  %673 = vmatpush1.msra.mxu0 %v198
  %674 = vmatprep.subr.mxu0 0.0
  %675 = vmatpush1.msra.mxu0 %v199
  %676 = vmatprep.subr.mxu0 0.0
  %677 = vmatpush1.msra.mxu0 %v200
  %678 = vmatprep.subr.mxu0 0.0
  %679 = vmatpush1.msra.mxu0 %v201
  %680 = vmatprep.subr.mxu0 0.0
  %681 = vmatpush1.msra.mxu0 0.0
  %682 = vmatprep.subr.mxu0 0.0
  %683 = vmatpush1.msra.mxu0 0.0
  %684 = vmatprep.subr.mxu0 0.0
  %685 = vmatpush1.msra.mxu0 0.0
  %686 = vmatprep.subr.mxu0 0.0
  %687 = vmatpush1.msra.mxu0 0.0
  %688 = vmatprep.subr.mxu0 0.0
  %689 = vmatpush1.msra.mxu0 0.0
  %690 = vmatprep.subr.mxu0 0.0
  %691 = vmatpush1.msra.mxu0 0.0
  %692 = vmatprep.subr.mxu0 0.0
  %693 = vmatpush1.msra.mxu0 0.0
  %694 = vmatprep.subr.mxu0 0.0
  %695 = vmatpush1.msra.mxu0 0.0
  %696 = vmatprep.subr.mxu0 0.0
  %697 = vmatpush1.msra.mxu0 0.0
  %698 = vmatprep.subr.mxu0 0.0
  %699 = vmatpush1.msra.mxu0 0.0
  %700 = vmatprep.subr.mxu0 0.0
  %701 = vmatpush1.msra.mxu0 0.0
  %702 = vmatprep.subr.mxu0 0.0
  %703 = vmatpush1.msra.mxu0 0.0
  %704 = vmatprep.subr.mxu0 0.0
  %705 = vmatpush1.msra.mxu0 0.0
  %706 = vmatprep.subr.mxu0 0.0
  %707 = vmatpush1.msra.mxu0 0.0
  %708 = vmatprep.subr.mxu0 0.0
  %709 = vmatpush1.msra.mxu0 0.0
  %710 = vmatprep.subr.mxu0 0.0
  %711 = vmatpush1.msra.mxu0 0.0
  %712 = vmatprep.subr.mxu0 0.0
  %713 = vmatpush1.msra.mxu0 0.0
  %714 = vmatprep.subr.mxu0 0.0
  %715 = vmatpush1.msra.mxu0 0.0
  %716 = vmatprep.subr.mxu0 0.0
  %717 = vmatpush1.msra.mxu0 0.0
  %718 = vmatprep.subr.mxu0 0.0
  %719 = vmatpush1.msra.mxu0 0.0
  %720 = vmatprep.subr.mxu0 0.0
  %721 = vmatpush1.msra.mxu0 0.0
  %722 = vmatprep.subr.mxu0 0.0
  %723 = vmatpush1.msra.mxu0 0.0
  %724 = vmatprep.subr.mxu0 0.0
  %725 = vmatpush1.msra.mxu0 0.0
  %726 = vmatprep.subr.mxu0 0.0
  %727 = vmatpush1.msra.mxu0 0.0
  %728 = vmatprep.subr.mxu0 0.0
  %729 = vmatpush1.msra.mxu0 0.0
  %730 = vmatprep.subr.mxu0 0.0
  %731 = vmatpush1.msra.mxu0 0.0
  %732 = vmatprep.subr.mxu0 0.0
  %733 = vmatpush1.msra.mxu0 0.0
  %734 = vmatprep.subr.mxu0 0.0
  %735 = vmatpush1.msra.mxu0 0.0
  %736 = vmatprep.mubr.f32.mxu0 0.0
  %737 = vmatmul.mubr.f32.gmra.mrb[0].mxu0 %v670
  %v738 = vpop.f32.mrb[0].mxu0
  %v739 = vadd.f32 0.0, %v738
  %v740 = vpop.f32.mrb[0].mxu0
  %741 = vdwg.mxu0
  %v742 = vadd.f32 %v666, %v739
  %v743 = vxor.u32 %v742, 2147483648
  %v744 = vmul.f32 %v743, 1.442695
  %v745 = vpow.pop %v744
  %v746 = vadd.f32 %v745, 1.0
  %v747 = vrcp.pop %v746
  %v748 = vmul.f32 1.0, %v747
  %v749 = vtanh.pop %v742
  %751 = vrot.lane.b32.xlu0 %v668, 32
  %v752 = vpop.permute.xlu0 %751
  %v754 = vmul.f32 %v748, %v752
  %756 = vrot.lane.b32.xlu0 %v749, 64
  %v757 = vpop.permute.xlu0 %756
  %v759 = vmul.f32 %v748, %v757
  %761 = vrot.lane.b32.xlu0 %v759, 32
  %v762 = vpop.permute.xlu0 %761
  %v764 = vadd.f32 %v754, %v762
  %v765 = vtanh.pop %v764
  %767 = vrot.lane.b32.xlu0 %v765, 64
  %v768 = vpop.permute.xlu0 %767
  %v770 = vmul.f32 %v748, %v768
  %772 = vrot.lane.b32.xlu0 %v770, 32
  %v773 = vpop.permute.xlu0 %772
  %775 = vst.msk [vmem:[#allocation4] sm:$0xff] %vm194, %v773
  %777 = vrot.lane.b32.xlu0 %v764, 96
  %v778 = vpop.permute.xlu0 %777
  %780 = vst.msk [vmem:[#allocation5] sm:$0xff] %vm194, %v778
  %781 = vst.msk [vmem:[#allocation3 + $0x20] sm:$0xff] %vm194, %v773
  %v782 = vld [vmem:[#allocation2 + $0x28] sm:$0xff]
  %v783 = vld [vmem:[#allocation4] sm:$0xff]
  %v784 = vld [vmem:[#allocation5] sm:$0xff]
  %v786 = vsel %vm194, %v783, 0
  %788 = vmatprep.subr.mxu0 0.0
  %789 = vmatpush1.msra.mxu0 %v198
  %790 = vmatprep.subr.mxu0 0.0
  %791 = vmatpush1.msra.mxu0 %v199
  %792 = vmatprep.subr.mxu0 0.0
  %793 = vmatpush1.msra.mxu0 %v200
  %794 = vmatprep.subr.mxu0 0.0
  %795 = vmatpush1.msra.mxu0 %v201
  %796 = vmatprep.subr.mxu0 0.0
  %797 = vmatpush1.msra.mxu0 0.0
  %798 = vmatprep.subr.mxu0 0.0
  %799 = vmatpush1.msra.mxu0 0.0
  %800 = vmatprep.subr.mxu0 0.0
  %801 = vmatpush1.msra.mxu0 0.0
  %802 = vmatprep.subr.mxu0 0.0
  %803 = vmatpush1.msra.mxu0 0.0
  %804 = vmatprep.subr.mxu0 0.0
  %805 = vmatpush1.msra.mxu0 0.0
  %806 = vmatprep.subr.mxu0 0.0
  %807 = vmatpush1.msra.mxu0 0.0
  %808 = vmatprep.subr.mxu0 0.0
  %809 = vmatpush1.msra.mxu0 0.0
  %810 = vmatprep.subr.mxu0 0.0
  %811 = vmatpush1.msra.mxu0 0.0
  %812 = vmatprep.subr.mxu0 0.0
  %813 = vmatpush1.msra.mxu0 0.0
  %814 = vmatprep.subr.mxu0 0.0
  %815 = vmatpush1.msra.mxu0 0.0
  %816 = vmatprep.subr.mxu0 0.0
  %817 = vmatpush1.msra.mxu0 0.0
  %818 = vmatprep.subr.mxu0 0.0
  %819 = vmatpush1.msra.mxu0 0.0
  %820 = vmatprep.subr.mxu0 0.0
  %821 = vmatpush1.msra.mxu0 0.0
  %822 = vmatprep.subr.mxu0 0.0
  %823 = vmatpush1.msra.mxu0 0.0
  %824 = vmatprep.subr.mxu0 0.0
  %825 = vmatpush1.msra.mxu0 0.0
  %826 = vmatprep.subr.mxu0 0.0
  %827 = vmatpush1.msra.mxu0 0.0
  %828 = vmatprep.subr.mxu0 0.0
  %829 = vmatpush1.msra.mxu0 0.0
  %830 = vmatprep.subr.mxu0 0.0
  %831 = vmatpush1.msra.mxu0 0.0
  %832 = vmatprep.subr.mxu0 0.0
  %833 = vmatpush1.msra.mxu0 0.0
  %834 = vmatprep.subr.mxu0 0.0
  %835 = vmatpush1.msra.mxu0 0.0
  %836 = vmatprep.subr.mxu0 0.0
  %837 = vmatpush1.msra.mxu0 0.0
  %838 = vmatprep.subr.mxu0 0.0
  %839 = vmatpush1.msra.mxu0 0.0
  %840 = vmatprep.subr.mxu0 0.0
  %841 = vmatpush1.msra.mxu0 0.0
  %842 = vmatprep.subr.mxu0 0.0
  %843 = vmatpush1.msra.mxu0 0.0
  %844 = vmatprep.subr.mxu0 0.0
  %845 = vmatpush1.msra.mxu0 0.0
  %846 = vmatprep.subr.mxu0 0.0
  %847 = vmatpush1.msra.mxu0 0.0
  %848 = vmatprep.subr.mxu0 0.0
  %849 = vmatpush1.msra.mxu0 0.0
  %850 = vmatprep.subr.mxu0 0.0
  %851 = vmatpush1.msra.mxu0 0.0
  %852 = vmatprep.mubr.f32.mxu0 0.0
  %853 = vmatmul.mubr.f32.gmra.mrb[0].mxu0 %v786
  %v854 = vpop.f32.mrb[0].mxu0
  %v855 = vadd.f32 0.0, %v854
  %v856 = vpop.f32.mrb[0].mxu0
  %857 = vdwg.mxu0
  %v858 = vadd.f32 %v782, %v855
  %v859 = vxor.u32 %v858, 2147483648
  %v860 = vmul.f32 %v859, 1.442695
  %v861 = vpow.pop %v860
  %v862 = vadd.f32 %v861, 1.0
  %v863 = vrcp.pop %v862
  %v864 = vmul.f32 1.0, %v863
  %v865 = vtanh.pop %v858
  %867 = vrot.lane.b32.xlu0 %v784, 32
  %v868 = vpop.permute.xlu0 %867
  %v870 = vmul.f32 %v864, %v868
  %872 = vrot.lane.b32.xlu0 %v865, 64
  %v873 = vpop.permute.xlu0 %872
  %v875 = vmul.f32 %v864, %v873
  %877 = vrot.lane.b32.xlu0 %v875, 32
  %v878 = vpop.permute.xlu0 %877
  %v880 = vadd.f32 %v870, %v878
  %v881 = vtanh.pop %v880
  %883 = vrot.lane.b32.xlu0 %v881, 64
  %v884 = vpop.permute.xlu0 %883
  %v886 = vmul.f32 %v864, %v884
  %888 = vrot.lane.b32.xlu0 %v886, 32
  %v889 = vpop.permute.xlu0 %888
  %891 = vst.msk [vmem:[#allocation4] sm:$0xff] %vm194, %v889
  %893 = vrot.lane.b32.xlu0 %v880, 96
  %v894 = vpop.permute.xlu0 %893
  %896 = vst.msk [vmem:[#allocation5] sm:$0xff] %vm194, %v894
  %897 = vst.msk [vmem:[#allocation3 + $0x28] sm:$0xff] %vm194, %v889
  %v898 = vld [vmem:[#allocation2 + $0x30] sm:$0xff]
  %v899 = vld [vmem:[#allocation4] sm:$0xff]
  %v900 = vld [vmem:[#allocation5] sm:$0xff]
  %v902 = vsel %vm194, %v899, 0
  %904 = vmatprep.subr.mxu0 0.0
  %905 = vmatpush1.msra.mxu0 %v198
  %906 = vmatprep.subr.mxu0 0.0
  %907 = vmatpush1.msra.mxu0 %v199
  %908 = vmatprep.subr.mxu0 0.0
  %909 = vmatpush1.msra.mxu0 %v200
  %910 = vmatprep.subr.mxu0 0.0
  %911 = vmatpush1.msra.mxu0 %v201
  %912 = vmatprep.subr.mxu0 0.0
  %913 = vmatpush1.msra.mxu0 0.0
  %914 = vmatprep.subr.mxu0 0.0
  %915 = vmatpush1.msra.mxu0 0.0
  %916 = vmatprep.subr.mxu0 0.0
  %917 = vmatpush1.msra.mxu0 0.0
  %918 = vmatprep.subr.mxu0 0.0
  %919 = vmatpush1.msra.mxu0 0.0
  %920 = vmatprep.subr.mxu0 0.0
  %921 = vmatpush1.msra.mxu0 0.0
  %922 = vmatprep.subr.mxu0 0.0
  %923 = vmatpush1.msra.mxu0 0.0
  %924 = vmatprep.subr.mxu0 0.0
  %925 = vmatpush1.msra.mxu0 0.0
  %926 = vmatprep.subr.mxu0 0.0
  %927 = vmatpush1.msra.mxu0 0.0
  %928 = vmatprep.subr.mxu0 0.0
  %929 = vmatpush1.msra.mxu0 0.0
  %930 = vmatprep.subr.mxu0 0.0
  %931 = vmatpush1.msra.mxu0 0.0
  %932 = vmatprep.subr.mxu0 0.0
  %933 = vmatpush1.msra.mxu0 0.0
  %934 = vmatprep.subr.mxu0 0.0
  %935 = vmatpush1.msra.mxu0 0.0
  %936 = vmatprep.subr.mxu0 0.0
  %937 = vmatpush1.msra.mxu0 0.0
  %938 = vmatprep.subr.mxu0 0.0
  %939 = vmatpush1.msra.mxu0 0.0
  %940 = vmatprep.subr.mxu0 0.0
  %941 = vmatpush1.msra.mxu0 0.0
  %942 = vmatprep.subr.mxu0 0.0
  %943 = vmatpush1.msra.mxu0 0.0
  %944 = vmatprep.subr.mxu0 0.0
  %945 = vmatpush1.msra.mxu0 0.0
  %946 = vmatprep.subr.mxu0 0.0
  %947 = vmatpush1.msra.mxu0 0.0
  %948 = vmatprep.subr.mxu0 0.0
  %949 = vmatpush1.msra.mxu0 0.0
  %950 = vmatprep.subr.mxu0 0.0
  %951 = vmatpush1.msra.mxu0 0.0
  %952 = vmatprep.subr.mxu0 0.0
  %953 = vmatpush1.msra.mxu0 0.0
  %954 = vmatprep.subr.mxu0 0.0
  %955 = vmatpush1.msra.mxu0 0.0
  %956 = vmatprep.subr.mxu0 0.0
  %957 = vmatpush1.msra.mxu0 0.0
  %958 = vmatprep.subr.mxu0 0.0
  %959 = vmatpush1.msra.mxu0 0.0
  %960 = vmatprep.subr.mxu0 0.0
  %961 = vmatpush1.msra.mxu0 0.0
  %962 = vmatprep.subr.mxu0 0.0
  %963 = vmatpush1.msra.mxu0 0.0
  %964 = vmatprep.subr.mxu0 0.0
  %965 = vmatpush1.msra.mxu0 0.0
  %966 = vmatprep.subr.mxu0 0.0
  %967 = vmatpush1.msra.mxu0 0.0
  %968 = vmatprep.mubr.f32.mxu0 0.0
  %969 = vmatmul.mubr.f32.gmra.mrb[0].mxu0 %v902
  %v970 = vpop.f32.mrb[0].mxu0
  %v971 = vadd.f32 0.0, %v970
  %v972 = vpop.f32.mrb[0].mxu0
  %973 = vdwg.mxu0
  %v974 = vadd.f32 %v898, %v971
  %v975 = vxor.u32 %v974, 2147483648
  %v976 = vmul.f32 %v975, 1.442695
  %v977 = vpow.pop %v976
  %v978 = vadd.f32 %v977, 1.0
  %v979 = vrcp.pop %v978
  %v980 = vmul.f32 1.0, %v979
  %v981 = vtanh.pop %v974
  %983 = vrot.lane.b32.xlu0 %v900, 32
  %v984 = vpop.permute.xlu0 %983
  %v986 = vmul.f32 %v980, %v984
  %988 = vrot.lane.b32.xlu0 %v981, 64
  %v989 = vpop.permute.xlu0 %988
  %v991 = vmul.f32 %v980, %v989
  %993 = vrot.lane.b32.xlu0 %v991, 32
  %v994 = vpop.permute.xlu0 %993
  %v996 = vadd.f32 %v986, %v994
  %v997 = vtanh.pop %v996
  %999 = vrot.lane.b32.xlu0 %v997, 64
  %v1000 = vpop.permute.xlu0 %999
  %v1002 = vmul.f32 %v980, %v1000
  %1004 = vrot.lane.b32.xlu0 %v1002, 32
  %v1005 = vpop.permute.xlu0 %1004
  %1007 = vst.msk [vmem:[#allocation4] sm:$0xff] %vm194, %v1005
  %1009 = vrot.lane.b32.xlu0 %v996, 96
  %v1010 = vpop.permute.xlu0 %1009
  %1012 = vst.msk [vmem:[#allocation5] sm:$0xff] %vm194, %v1010
  %1013 = vst.msk [vmem:[#allocation3 + $0x30] sm:$0xff] %vm194, %v1005
  %v1014 = vld [vmem:[#allocation2 + $0x38] sm:$0xff]
  %v1015 = vld [vmem:[#allocation4] sm:$0xff]
  %v1016 = vld [vmem:[#allocation5] sm:$0xff]
  %v1018 = vsel %vm194, %v1015, 0
  %1020 = vmatprep.subr.mxu0 0.0
  %1021 = vmatpush1.msra.mxu0 %v198
  %1022 = vmatprep.subr.mxu0 0.0
  %1023 = vmatpush1.msra.mxu0 %v199
  %1024 = vmatprep.subr.mxu0 0.0
  %1025 = vmatpush1.msra.mxu0 %v200
  %1026 = vmatprep.subr.mxu0 0.0
  %1027 = vmatpush1.msra.mxu0 %v201
  %1028 = vmatprep.subr.mxu0 0.0
  %1029 = vmatpush1.msra.mxu0 0.0
  %1030 = vmatprep.subr.mxu0 0.0
  %1031 = vmatpush1.msra.mxu0 0.0
  %1032 = vmatprep.subr.mxu0 0.0
  %1033 = vmatpush1.msra.mxu0 0.0
  %1034 = vmatprep.subr.mxu0 0.0
  %1035 = vmatpush1.msra.mxu0 0.0
  %1036 = vmatprep.subr.mxu0 0.0
  %1037 = vmatpush1.msra.mxu0 0.0
  %1038 = vmatprep.subr.mxu0 0.0
  %1039 = vmatpush1.msra.mxu0 0.0
  %1040 = vmatprep.subr.mxu0 0.0
  %1041 = vmatpush1.msra.mxu0 0.0
  %1042 = vmatprep.subr.mxu0 0.0
  %1043 = vmatpush1.msra.mxu0 0.0
  %1044 = vmatprep.subr.mxu0 0.0
  %1045 = vmatpush1.msra.mxu0 0.0
  %1046 = vmatprep.subr.mxu0 0.0
  %1047 = vmatpush1.msra.mxu0 0.0
  %1048 = vmatprep.subr.mxu0 0.0
  %1049 = vmatpush1.msra.mxu0 0.0
  %1050 = vmatprep.subr.mxu0 0.0
  %1051 = vmatpush1.msra.mxu0 0.0
  %1052 = vmatprep.subr.mxu0 0.0
  %1053 = vmatpush1.msra.mxu0 0.0
  %1054 = vmatprep.subr.mxu0 0.0
  %1055 = vmatpush1.msra.mxu0 0.0
  %1056 = vmatprep.subr.mxu0 0.0
  %1057 = vmatpush1.msra.mxu0 0.0
  %1058 = vmatprep.subr.mxu0 0.0
  %1059 = vmatpush1.msra.mxu0 0.0
  %1060 = vmatprep.subr.mxu0 0.0
  %1061 = vmatpush1.msra.mxu0 0.0
  %1062 = vmatprep.subr.mxu0 0.0
  %1063 = vmatpush1.msra.mxu0 0.0
  %1064 = vmatprep.subr.mxu0 0.0
  %1065 = vmatpush1.msra.mxu0 0.0
  %1066 = vmatprep.subr.mxu0 0.0
  %1067 = vmatpush1.msra.mxu0 0.0
  %1068 = vmatprep.subr.mxu0 0.0
  %1069 = vmatpush1.msra.mxu0 0.0
  %1070 = vmatprep.subr.mxu0 0.0
  %1071 = vmatpush1.msra.mxu0 0.0
  %1072 = vmatprep.subr.mxu0 0.0
  %1073 = vmatpush1.msra.mxu0 0.0
  %1074 = vmatprep.subr.mxu0 0.0
  %1075 = vmatpush1.msra.mxu0 0.0
  %1076 = vmatprep.subr.mxu0 0.0
  %1077 = vmatpush1.msra.mxu0 0.0
  %1078 = vmatprep.subr.mxu0 0.0
  %1079 = vmatpush1.msra.mxu0 0.0
  %1080 = vmatprep.subr.mxu0 0.0
  %1081 = vmatpush1.msra.mxu0 0.0
  %1082 = vmatprep.subr.mxu0 0.0
  %1083 = vmatpush1.msra.mxu0 0.0
  %1084 = vmatprep.mubr.f32.mxu0 0.0
  %1085 = vmatmul.mubr.f32.gmra.mrb[0].mxu0 %v1018
  %v1086 = vpop.f32.mrb[0].mxu0
  %v1087 = vadd.f32 0.0, %v1086
  %v1088 = vpop.f32.mrb[0].mxu0
  %1089 = vdwg.mxu0
  %v1090 = vadd.f32 %v1014, %v1087
  %v1091 = vxor.u32 %v1090, 2147483648
  %v1092 = vmul.f32 %v1091, 1.442695
  %v1093 = vpow.pop %v1092
  %v1094 = vadd.f32 %v1093, 1.0
  %v1095 = vrcp.pop %v1094
  %v1096 = vmul.f32 1.0, %v1095
  %v1097 = vtanh.pop %v1090
  %1099 = vrot.lane.b32.xlu0 %v1016, 32
  %v1100 = vpop.permute.xlu0 %1099
  %v1102 = vmul.f32 %v1096, %v1100
  %1104 = vrot.lane.b32.xlu0 %v1097, 64
  %v1105 = vpop.permute.xlu0 %1104
  %v1107 = vmul.f32 %v1096, %v1105
  %1109 = vrot.lane.b32.xlu0 %v1107, 32
  %v1110 = vpop.permute.xlu0 %1109
  %v1112 = vadd.f32 %v1102, %v1110
  %v1113 = vtanh.pop %v1112
  %1115 = vrot.lane.b32.xlu0 %v1113, 64
  %v1116 = vpop.permute.xlu0 %1115
  %v1118 = vmul.f32 %v1096, %v1116
  %1120 = vrot.lane.b32.xlu0 %v1118, 32
  %v1121 = vpop.permute.xlu0 %1120
  %1123 = vst.msk [vmem:[#allocation4] sm:$0xff] %vm194, %v1121
  %1125 = vrot.lane.b32.xlu0 %v1112, 96
  %v1126 = vpop.permute.xlu0 %1125
  %1128 = vst.msk [vmem:[#allocation5] sm:$0xff] %vm194, %v1126
  %1129 = vst.msk [vmem:[#allocation3 + $0x38] sm:$0xff] %vm194, %v1121
  %v1130 = vld [vmem:[#allocation3] sm:$0xff]
  %v1131 = vld [vmem:[#allocation3 + $0x8] sm:$0xff]
  %v1132 = vld [vmem:[#allocation3 + $0x10] sm:$0xff]
  %v1133 = vld [vmem:[#allocation3 + $0x18] sm:$0xff]
  %v1134 = vld [vmem:[#allocation3 + $0x20] sm:$0xff]
  %v1135 = vld [vmem:[#allocation3 + $0x28] sm:$0xff]
  %v1136 = vld [vmem:[#allocation3 + $0x30] sm:$0xff]
  %v1137 = vld [vmem:[#allocation3 + $0x38] sm:$0xff]
  %v1138 = vld [vmem:[%s4] sm:$0xff]
  %v1139 = vld [vmem:[%s4 + $0x8] sm:$0xff]
  %v1140 = vld [vmem:[%s4 + $0x10] sm:$0xff]
  %v1141 = vld [vmem:[%s4 + $0x18] sm:$0xff]
  %v1142 = vld [vmem:[%s5] sm:$0x1]
  %v1144 = vlaneseq
  %v1145 = vshrl.u32 %v1144, 7
  %v1146 = vsub.s32 0, %v1145
  %v1147 = vrot.slane %v1142, %v1146
  %v1150 = vsel %vm194, %v1130, 0
  %v1153 = vsel %vm194, %v1131, 0
  %v1156 = vsel %vm194, %v1132, 0
  %v1159 = vsel %vm194, %v1133, 0
  %v1162 = vsel %vm194, %v1134, 0
  %v1165 = vsel %vm194, %v1135, 0
  %v1168 = vsel %vm194, %v1136, 0
  %v1171 = vsel %vm194, %v1137, 0
  %1173 = vmatprep.subr.mxu0 0.0
  %1174 = vmatpush1.msra.mxu0 %v1138
  %1175 = vmatprep.subr.mxu0 0.0
  %1176 = vmatpush1.msra.mxu0 %v1139
  %1177 = vmatprep.subr.mxu0 0.0
  %1178 = vmatpush1.msra.mxu0 %v1140
  %1179 = vmatprep.subr.mxu0 0.0
  %1180 = vmatpush1.msra.mxu0 %v1141
  %1181 = vmatprep.subr.mxu0 0.0
  %1182 = vmatpush1.msra.mxu0 0.0
  %1183 = vmatprep.subr.mxu0 0.0
  %1184 = vmatpush1.msra.mxu0 0.0
  %1185 = vmatprep.subr.mxu0 0.0
  %1186 = vmatpush1.msra.mxu0 0.0
  %1187 = vmatprep.subr.mxu0 0.0
  %1188 = vmatpush1.msra.mxu0 0.0
  %1189 = vmatprep.subr.mxu0 0.0
  %1190 = vmatpush1.msra.mxu0 0.0
  %1191 = vmatprep.subr.mxu0 0.0
  %1192 = vmatpush1.msra.mxu0 0.0
  %1193 = vmatprep.subr.mxu0 0.0
  %1194 = vmatpush1.msra.mxu0 0.0
  %1195 = vmatprep.subr.mxu0 0.0
  %1196 = vmatpush1.msra.mxu0 0.0
  %1197 = vmatprep.subr.mxu0 0.0
  %1198 = vmatpush1.msra.mxu0 0.0
  %1199 = vmatprep.subr.mxu0 0.0
  %1200 = vmatpush1.msra.mxu0 0.0
  %1201 = vmatprep.subr.mxu0 0.0
  %1202 = vmatpush1.msra.mxu0 0.0
  %1203 = vmatprep.subr.mxu0 0.0
  %1204 = vmatpush1.msra.mxu0 0.0
  %1205 = vmatprep.subr.mxu0 0.0
  %1206 = vmatpush1.msra.mxu0 0.0
  %1207 = vmatprep.subr.mxu0 0.0
  %1208 = vmatpush1.msra.mxu0 0.0
  %1209 = vmatprep.subr.mxu0 0.0
  %1210 = vmatpush1.msra.mxu0 0.0
  %1211 = vmatprep.subr.mxu0 0.0
  %1212 = vmatpush1.msra.mxu0 0.0
  %1213 = vmatprep.subr.mxu0 0.0
  %1214 = vmatpush1.msra.mxu0 0.0
  %1215 = vmatprep.subr.mxu0 0.0
  %1216 = vmatpush1.msra.mxu0 0.0
  %1217 = vmatprep.subr.mxu0 0.0
  %1218 = vmatpush1.msra.mxu0 0.0
  %1219 = vmatprep.subr.mxu0 0.0
  %1220 = vmatpush1.msra.mxu0 0.0
  %1221 = vmatprep.subr.mxu0 0.0
  %1222 = vmatpush1.msra.mxu0 0.0
  %1223 = vmatprep.subr.mxu0 0.0
  %1224 = vmatpush1.msra.mxu0 0.0
  %1225 = vmatprep.subr.mxu0 0.0
  %1226 = vmatpush1.msra.mxu0 0.0
  %1227 = vmatprep.subr.mxu0 0.0
  %1228 = vmatpush1.msra.mxu0 0.0
  %1229 = vmatprep.subr.mxu0 0.0
  %1230 = vmatpush1.msra.mxu0 0.0
  %1231 = vmatprep.subr.mxu0 0.0
  %1232 = vmatpush1.msra.mxu0 0.0
  %1233 = vmatprep.subr.mxu0 0.0
  %1234 = vmatpush1.msra.mxu0 0.0
  %1235 = vmatprep.subr.mxu0 0.0
  %1236 = vmatpush1.msra.mxu0 0.0
  %1237 = vmatprep.mubr.f32.mxu0 0.0
  %1238 = vmatmul.mubr.f32.gmra.mrb[0].mxu0 %v1150
  %v1239 = vpop.f32.mrb[0].mxu0
  %v1240 = vadd.f32 %v1147, %v1239
  %v1241 = vpop.f32.mrb[0].mxu0
  %1242 = vmatprep.mubr.f32.mxu0 0.0
  %1243 = vmatmul.mubr.f32.gmra.mrb[0].mxu0 %v1153
  %v1244 = vpop.f32.mrb[0].mxu0
  %v1245 = vadd.f32 %v1147, %v1244
  %v1246 = vpop.f32.mrb[0].mxu0
  %1247 = vmatprep.mubr.f32.mxu0 0.0
  %1248 = vmatmul.mubr.f32.gmra.mrb[0].mxu0 %v1156
  %v1249 = vpop.f32.mrb[0].mxu0
  %v1250 = vadd.f32 %v1147, %v1249
  %v1251 = vpop.f32.mrb[0].mxu0
  %1252 = vmatprep.mubr.f32.mxu0 0.0
  %1253 = vmatmul.mubr.f32.gmra.mrb[0].mxu0 %v1159
  %v1254 = vpop.f32.mrb[0].mxu0
  %v1255 = vadd.f32 %v1147, %v1254
  %v1256 = vpop.f32.mrb[0].mxu0
  %1257 = vmatprep.mubr.f32.mxu0 0.0
  %1258 = vmatmul.mubr.f32.gmra.mrb[0].mxu0 %v1162
  %v1259 = vpop.f32.mrb[0].mxu0
  %v1260 = vadd.f32 %v1147, %v1259
  %v1261 = vpop.f32.mrb[0].mxu0
  %1262 = vmatprep.mubr.f32.mxu0 0.0
  %1263 = vmatmul.mubr.f32.gmra.mrb[0].mxu0 %v1165
  %v1264 = vpop.f32.mrb[0].mxu0
  %v1265 = vadd.f32 %v1147, %v1264
  %v1266 = vpop.f32.mrb[0].mxu0
  %1267 = vmatprep.mubr.f32.mxu0 0.0
  %1268 = vmatmul.mubr.f32.gmra.mrb[0].mxu0 %v1168
  %v1269 = vpop.f32.mrb[0].mxu0
  %v1270 = vadd.f32 %v1147, %v1269
  %v1271 = vpop.f32.mrb[0].mxu0
  %1272 = vmatprep.mubr.f32.mxu0 0.0
  %1273 = vmatmul.mubr.f32.gmra.mrb[0].mxu0 %v1171
  %v1274 = vpop.f32.mrb[0].mxu0
  %v1275 = vadd.f32 %v1147, %v1274
  %v1276 = vpop.f32.mrb[0].mxu0
  %1277 = vdwg.mxu0
  %vm1278 = vcmask 130048
  %1279 = vst.msk [vmem:[%s8] sm:$0xff] %vm1278, %v1240
  %1280 = vst.msk [vmem:[%s8 + $0x8] sm:$0xff] %vm1278, %v1245
  %1281 = vst.msk [vmem:[%s8 + $0x10] sm:$0xff] %vm1278, %v1250
  %1282 = vst.msk [vmem:[%s8 + $0x18] sm:$0xff] %vm1278, %v1255
  %1283 = vst.msk [vmem:[%s8 + $0x20] sm:$0xff] %vm1278, %v1260
  %1284 = vst.msk [vmem:[%s8 + $0x28] sm:$0xff] %vm1278, %v1265
  %1285 = vst.msk [vmem:[%s8 + $0x30] sm:$0xff] %vm1278, %v1270
  %1286 = vst.msk [vmem:[%s8 + $0x38] sm:$0xff] %vm1278, %v1275
  %v1287 = vld [vmem:[#allocation4] sm:$0xff]
  %1288 = vst.msk [vmem:[%s9] sm:$0xff] %vm194, %v1287
  %v1289 = vld [vmem:[#allocation5] sm:$0xff]
  %1290 = vst.msk [vmem:[%s10] sm:$0xff] %vm194, %v1289
  // Predicated region
  $region34: #{name_generator_forward.1} parent=0 // pred_check
    _
  $region35: #{name_generator_forward.1} parent=0 // pred_check_branch
    %1292 = sbr.rel (0) target = $region37
  $region36: #{name_generator_forward.1} parent=0 // pred_region
    _
  $region37: #{name_generator_forward.1} parent=0 // pred_fallthru
    _
  // Predicated region
  $region38: #{name_generator_forward.1} parent=0 // pred_check
    _
  $region39: #{name_generator_forward.1} parent=0 // pred_check_branch
    %1294 = sbr.rel (0) target = $region41
  $region40: #{name_generator_forward.1} parent=0 // pred_region
    _
  $region41: #{name_generator_forward.1} parent=0 // pred_fallthru
    _
  // Predicated region
  $region42: #{name_generator_forward.1} parent=0 // pred_check
    _
  $region43: #{name_generator_forward.1} parent=0 // pred_check_branch
    %1296 = sbr.rel (0) target = $region45
  $region44: #{name_generator_forward.1} parent=0 // pred_region
    _
  $region45: #{name_generator_forward.1} parent=0 // pred_fallthru
    _
  // Predicated region
  $region46: #{name_generator_forward.1} parent=0 // pred_check
    _
  $region47: #{name_generator_forward.1} parent=0 // pred_check_branch
    %1298 = sbr.rel (0) target = $region49
  $region48: #{name_generator_forward.1} parent=0 // pred_region
    _
  $region49: #{name_generator_forward.1} parent=0 // pred_fallthru
    _
  // Predicated region
  $region50: #{name_generator_forward.1} parent=0 // pred_check
    _
  $region51: #{name_generator_forward.1} parent=0 // pred_check_branch
    %1300 = sbr.rel (0) target = $region53
  $region52: #{name_generator_forward.1} parent=0 // pred_region
    _
  $region53: #{name_generator_forward.1} parent=0 // pred_fallthru
    _
  // Predicated region
  $region54: #{name_generator_forward.1} parent=0 // pred_check
    _
  $region55: #{name_generator_forward.1} parent=0 // pred_check_branch
    %1302 = sbr.rel (0) target = $region57
  $region56: #{name_generator_forward.1} parent=0 // pred_region
    _
  $region57: #{name_generator_forward.1} parent=0 // pred_fallthru
    _

</llo_original>
